<compile_context>
chip_gen: v7x
topology: tpu7x:2x2x1
jax: 0.10.0
libtpu: 0.0.40
codegen_flags: <defaults>
</compile_context>

<pallas_src>
import jax
import jax.numpy as jnp
from jax import lax
from jax.experimental import pallas as pl
from jax.experimental.pallas import tpu as pltpu

H = 28       # real LSTM hidden size (PyTorch)
HP = 32      # padded hidden size  (4*HP = 128 = one lane width)
BP = 8       # padded batch rows   (one sublane group)
EMB = 64     # embedding / LSTM input size
OUT = 12     # projection output size
VP = 128     # padded vocab rows of the fused table (multiple of 128 lanes for the LHS)


def lstm_proj_kernel(ids_ref, xtab_ref, whh_ref, wp_ref, bp_ref, out_ref):
    """ids: (B,T) int32 in SMEM; xtab: (VP,128); whh: (32,128); wp: (32,12); bp: (1,12)."""
    B, T = ids_ref.shape

    # ---- embedding gather as a single one-hot MXU matmul (off the serial chain) ----
    # onehot[t*BP + b, v] = 1  iff  ids[b, t] == v ; padded batch rows (b >= B) stay 0.
    lane = lax.broadcasted_iota(jnp.int32, (T * BP, VP), 1)
    row = lax.broadcasted_iota(jnp.int32, (T * BP, VP), 0)
    onehot = jnp.zeros((T * BP, VP), jnp.float32)
    for t in range(T):
        for b in range(B):
            hit = (row == (t * BP + b)) & (lane == ids_ref[b, t])
            onehot = onehot + jnp.where(hit, 1.0, 0.0)
    # All T*B gathered pre-activations (x @ W_ih^T + b) in one matmul: (T*BP,VP)@(VP,4HP)
    xg = jnp.dot(onehot, xtab_ref[...], preferred_element_type=jnp.float32)   # (T*BP, 128)

    whh = whh_ref[...]                               # (HP, 4*HP), loop-invariant

    # ---- LSTM recurrence: ONE (BP,HP)@(HP,4HP) matmul per step, fully unrolled ------
    h = jnp.zeros((BP, HP), jnp.float32)
    c = jnp.zeros((BP, HP), jnp.float32)
    for t in range(T):                               # T static & small -> full unroll
        z = xg[t * BP:(t + 1) * BP, :] + jnp.dot(
            h, whh, preferred_element_type=jnp.float32)              # (BP, 128)
        # One full-width sigmoid (single EUP issue) via 0.5*(1 + tanh(0.5*z)).
        sig = 0.5 * (jnp.tanh(0.5 * z) + 1.0)
        i = sig[:, 0 * HP:1 * HP]
        f = sig[:, 1 * HP:2 * HP]
        g = jnp.tanh(z[:, 2 * HP:3 * HP])
        o = sig[:, 3 * HP:4 * HP]
        c = f * c + i * g
        h = o * jnp.tanh(c)

    # ---- final projection on last hidden state --------------------------------------
    proj = jnp.dot(h, wp_ref[...], preferred_element_type=jnp.float32) + bp_ref[...]
    out_ref[...] = proj[:B, :]


def pack_params(params):
    """One-time repack of PyTorch-layout params into kernel layout (gate order i,f,g,o)."""
    emb = params["emb"]                                   # (vocab, 64)
    w_ih, w_hh = params["w_ih"], params["w_hh"]           # (4H,64), (4H,H)
    b = params["b_ih"] + params["b_hh"]                   # (4H,)
    w_proj, b_proj = params["w_proj"], params["b_proj"]   # (12,H), (12,)

    vocab = emb.shape[0]
    assert vocab <= VP, "increase VP (pad vocab to a multiple of 128)"
    pad_h = HP - H
    # W_ih^T fused over gates, each gate padded 28->32 output lanes -> (64, 128)
    w_ih_k = jnp.pad(jnp.transpose(w_ih.reshape(4, H, EMB), (2, 0, 1)),
                     ((0, 0), (0, 0), (0, pad_h))).reshape(EMB, 4 * HP)
    b_k = jnp.pad(b.reshape(4, H), ((0, 0), (0, pad_h))).reshape(1, 4 * HP)
    # Fold input projection + bias into the embedding table, pad vocab -> VP rows: (VP, 128)
    xtab = jnp.dot(emb, w_ih_k, preferred_element_type=jnp.float32) + b_k
    xtab = jnp.pad(xtab, ((0, VP - vocab), (0, 0)))
    # W_hh^T fused over gates, ZERO-padded on both in (28->32) and out (28->32) dims.
    # This zero padding is the correctness invariant that keeps padded lanes inert.
    whh_k = jnp.pad(jnp.transpose(w_hh.reshape(4, H, H), (2, 0, 1)),
                    ((0, pad_h), (0, 0), (0, pad_h))).reshape(HP, 4 * HP)
    wp_k = jnp.pad(w_proj.T, ((0, pad_h), (0, 0)))        # (32, 12), zero-padded rows
    bp_k = b_proj.reshape(1, OUT)                          # (1, 12)
    return {"xtab": xtab, "whh": whh_k, "wp": wp_k, "bp": bp_k}


def qmodel_forward(token_ids, packed):
    """token_ids: (B, T) int32. Returns (B, 12) float32."""
    B, T = token_ids.shape
    assert B <= BP, "for B > 8 add a leading 'parallel' batch grid axis over BP-row blocks"
    smem = pl.BlockSpec(memory_space=pltpu.MemorySpace.SMEM)
    vmem = pl.BlockSpec(memory_space=pltpu.MemorySpace.VMEM)
    return pl.pallas_call(
        lstm_proj_kernel,
        out_shape=jax.ShapeDtypeStruct((B, OUT), jnp.float32),
        in_specs=[smem, vmem, vmem, vmem, vmem],
        out_specs=vmem,
    )(token_ids.astype(jnp.int32), packed["xtab"], packed["whh"],
      packed["wp"], packed["bp"])


def qmodel_reference(token_ids, params):
    """Pure-JAX reference mirroring PyTorch LSTM semantics."""
    emb = params["emb"][token_ids]                         # (B, T, 64)
    w_ih, w_hh = params["w_ih"], params["w_hh"]
    b = params["b_ih"] + params["b_hh"]
    B, T, _ = emb.shape
    h = jnp.zeros((B, H), jnp.float32)
    c = jnp.zeros((B, H), jnp.float32)
    for t in range(T):
        z = emb[:, t, :] @ w_ih.T + h @ w_hh.T + b         # (B, 4H)
        i = jax.nn.sigmoid(z[:, 0:H])
        f = jax.nn.sigmoid(z[:, H:2 * H])
        g = jnp.tanh(z[:, 2 * H:3 * H])
        o = jax.nn.sigmoid(z[:, 3 * H:4 * H])
        c = f * c + i * g
        h = o * jnp.tanh(c)
    return h @ params["w_proj"].T + params["b_proj"]


def init_params(key, vocab_size=50, emb_dim=EMB, hidden=H, out_dim=OUT):
    ks = jax.random.split(key, 7)
    s = 1.0 / jnp.sqrt(hidden)
    return {
        "emb": jax.random.normal(ks[0], (vocab_size, emb_dim), jnp.float32),
        "w_ih": jax.random.uniform(ks[1], (4 * hidden, emb_dim), jnp.float32, -s, s),
        "w_hh": jax.random.uniform(ks[2], (4 * hidden, hidden), jnp.float32, -s, s),
        "b_ih": jax.random.uniform(ks[3], (4 * hidden,), jnp.float32, -s, s),
        "b_hh": jax.random.uniform(ks[4], (4 * hidden,), jnp.float32, -s, s),
        "w_proj": jax.random.uniform(ks[5], (out_dim, hidden), jnp.float32, -s, s),
        "b_proj": jax.random.uniform(ks[6], (out_dim,), jnp.float32, -s, s),
    }


if __name__ == "__main__":
    key = jax.random.PRNGKey(0)
    pkey, tkey = jax.random.split(key)
    params = init_params(pkey)
    packed = pack_params(params)                           # one-time repack

    B, T = 2, 8
    token_ids = jax.random.randint(tkey, (B, T), 0, params["emb"].shape[0], jnp.int32)

    out = qmodel_forward(token_ids, packed)
    out = jax.block_until_ready(out)

    ref = qmodel_reference(token_ids, params)
    assert out.shape == (B, OUT)
    assert jnp.allclose(out, ref, atol=1e-4, rtol=1e-4), "mismatch vs. reference"
    print("KERNEL_OK")
</pallas_src>

<mosaic_0001>
module attributes {stable_mosaic.version = 11 : i64} {
  func.func @lstm_proj_kernel(%arg0: memref<2x8xi32, #tpu.memory_space<smem>>, %arg1: memref<128x128xf32, #tpu.memory_space<vmem>>, %arg2: memref<32x128xf32, #tpu.memory_space<vmem>>, %arg3: memref<32x12xf32, #tpu.memory_space<vmem>>, %arg4: memref<1x12xf32, #tpu.memory_space<vmem>>, %arg5: memref<2x12xf32, #tpu.memory_space<vmem>>) attributes {dimension_semantics = [], scalar_prefetch = 0 : i64, scratch_operands = 0 : i64, tpu.core_type = #tpu.core_type<tc>} {
    %0 = tpu.iota {dimensions = array<i32: 1>} : vector<64x128xi32>
    %1 = tpu.iota {dimensions = array<i32: 0>} : vector<64x128xi32>
    %cst = arith.constant 0.000000e+00 : f32
    %2 = vector.broadcast %cst : f32 to vector<64x128xf32>
    %c0_i32 = arith.constant 0 : i32
    %3 = vector.broadcast %c0_i32 : i32 to vector<64x128xi32>
    %4 = arith.cmpi eq, %1, %3 : vector<64x128xi32>
    %c0 = arith.constant 0 : index
    %c0_0 = arith.constant 0 : index
    %5 = memref.load %arg0[%c0, %c0_0] : memref<2x8xi32, #tpu.memory_space<smem>>
    %6 = vector.broadcast %5 : i32 to vector<64x128xi32>
    %7 = arith.cmpi eq, %0, %6 : vector<64x128xi32>
    %8 = arith.andi %4, %7 : vector<64x128xi1>
    %cst_1 = arith.constant 1.000000e+00 : f32
    %cst_2 = arith.constant 0.000000e+00 : f32
    %9 = vector.broadcast %cst_1 : f32 to vector<64x128xf32>
    %10 = vector.broadcast %cst_2 : f32 to vector<64x128xf32>
    %11 = arith.select %8, %9, %10 : vector<64x128xi1>, vector<64x128xf32>
    %12 = arith.addf %2, %11 : vector<64x128xf32>
    %c1_i32 = arith.constant 1 : i32
    %13 = vector.broadcast %c1_i32 : i32 to vector<64x128xi32>
    %14 = arith.cmpi eq, %1, %13 : vector<64x128xi32>
    %c1 = arith.constant 1 : index
    %c0_3 = arith.constant 0 : index
    %15 = memref.load %arg0[%c1, %c0_3] : memref<2x8xi32, #tpu.memory_space<smem>>
    %16 = vector.broadcast %15 : i32 to vector<64x128xi32>
    %17 = arith.cmpi eq, %0, %16 : vector<64x128xi32>
    %18 = arith.andi %14, %17 : vector<64x128xi1>
    %cst_4 = arith.constant 1.000000e+00 : f32
    %cst_5 = arith.constant 0.000000e+00 : f32
    %19 = vector.broadcast %cst_4 : f32 to vector<64x128xf32>
    %20 = vector.broadcast %cst_5 : f32 to vector<64x128xf32>
    %21 = arith.select %18, %19, %20 : vector<64x128xi1>, vector<64x128xf32>
    %22 = arith.addf %12, %21 : vector<64x128xf32>
    %c8_i32 = arith.constant 8 : i32
    %23 = vector.broadcast %c8_i32 : i32 to vector<64x128xi32>
    %24 = arith.cmpi eq, %1, %23 : vector<64x128xi32>
    %c0_6 = arith.constant 0 : index
    %c1_7 = arith.constant 1 : index
    %25 = memref.load %arg0[%c0_6, %c1_7] : memref<2x8xi32, #tpu.memory_space<smem>>
    %26 = vector.broadcast %25 : i32 to vector<64x128xi32>
    %27 = arith.cmpi eq, %0, %26 : vector<64x128xi32>
    %28 = arith.andi %24, %27 : vector<64x128xi1>
    %cst_8 = arith.constant 1.000000e+00 : f32
    %cst_9 = arith.constant 0.000000e+00 : f32
    %29 = vector.broadcast %cst_8 : f32 to vector<64x128xf32>
    %30 = vector.broadcast %cst_9 : f32 to vector<64x128xf32>
    %31 = arith.select %28, %29, %30 : vector<64x128xi1>, vector<64x128xf32>
    %32 = arith.addf %22, %31 : vector<64x128xf32>
    %c9_i32 = arith.constant 9 : i32
    %33 = vector.broadcast %c9_i32 : i32 to vector<64x128xi32>
    %34 = arith.cmpi eq, %1, %33 : vector<64x128xi32>
    %c1_10 = arith.constant 1 : index
    %c1_11 = arith.constant 1 : index
    %35 = memref.load %arg0[%c1_10, %c1_11] : memref<2x8xi32, #tpu.memory_space<smem>>
    %36 = vector.broadcast %35 : i32 to vector<64x128xi32>
    %37 = arith.cmpi eq, %0, %36 : vector<64x128xi32>
    %38 = arith.andi %34, %37 : vector<64x128xi1>
    %cst_12 = arith.constant 1.000000e+00 : f32
    %cst_13 = arith.constant 0.000000e+00 : f32
    %39 = vector.broadcast %cst_12 : f32 to vector<64x128xf32>
    %40 = vector.broadcast %cst_13 : f32 to vector<64x128xf32>
    %41 = arith.select %38, %39, %40 : vector<64x128xi1>, vector<64x128xf32>
    %42 = arith.addf %32, %41 : vector<64x128xf32>
    %c16_i32 = arith.constant 16 : i32
    %43 = vector.broadcast %c16_i32 : i32 to vector<64x128xi32>
    %44 = arith.cmpi eq, %1, %43 : vector<64x128xi32>
    %c0_14 = arith.constant 0 : index
    %c2 = arith.constant 2 : index
    %45 = memref.load %arg0[%c0_14, %c2] : memref<2x8xi32, #tpu.memory_space<smem>>
    %46 = vector.broadcast %45 : i32 to vector<64x128xi32>
    %47 = arith.cmpi eq, %0, %46 : vector<64x128xi32>
    %48 = arith.andi %44, %47 : vector<64x128xi1>
    %cst_15 = arith.constant 1.000000e+00 : f32
    %cst_16 = arith.constant 0.000000e+00 : f32
    %49 = vector.broadcast %cst_15 : f32 to vector<64x128xf32>
    %50 = vector.broadcast %cst_16 : f32 to vector<64x128xf32>
    %51 = arith.select %48, %49, %50 : vector<64x128xi1>, vector<64x128xf32>
    %52 = arith.addf %42, %51 : vector<64x128xf32>
    %c17_i32 = arith.constant 17 : i32
    %53 = vector.broadcast %c17_i32 : i32 to vector<64x128xi32>
    %54 = arith.cmpi eq, %1, %53 : vector<64x128xi32>
    %c1_17 = arith.constant 1 : index
    %c2_18 = arith.constant 2 : index
    %55 = memref.load %arg0[%c1_17, %c2_18] : memref<2x8xi32, #tpu.memory_space<smem>>
    %56 = vector.broadcast %55 : i32 to vector<64x128xi32>
    %57 = arith.cmpi eq, %0, %56 : vector<64x128xi32>
    %58 = arith.andi %54, %57 : vector<64x128xi1>
    %cst_19 = arith.constant 1.000000e+00 : f32
    %cst_20 = arith.constant 0.000000e+00 : f32
    %59 = vector.broadcast %cst_19 : f32 to vector<64x128xf32>
    %60 = vector.broadcast %cst_20 : f32 to vector<64x128xf32>
    %61 = arith.select %58, %59, %60 : vector<64x128xi1>, vector<64x128xf32>
    %62 = arith.addf %52, %61 : vector<64x128xf32>
    %c24_i32 = arith.constant 24 : i32
    %63 = vector.broadcast %c24_i32 : i32 to vector<64x128xi32>
    %64 = arith.cmpi eq, %1, %63 : vector<64x128xi32>
    %c0_21 = arith.constant 0 : index
    %c3 = arith.constant 3 : index
    %65 = memref.load %arg0[%c0_21, %c3] : memref<2x8xi32, #tpu.memory_space<smem>>
    %66 = vector.broadcast %65 : i32 to vector<64x128xi32>
    %67 = arith.cmpi eq, %0, %66 : vector<64x128xi32>
    %68 = arith.andi %64, %67 : vector<64x128xi1>
    %cst_22 = arith.constant 1.000000e+00 : f32
    %cst_23 = arith.constant 0.000000e+00 : f32
    %69 = vector.broadcast %cst_22 : f32 to vector<64x128xf32>
    %70 = vector.broadcast %cst_23 : f32 to vector<64x128xf32>
    %71 = arith.select %68, %69, %70 : vector<64x128xi1>, vector<64x128xf32>
    %72 = arith.addf %62, %71 : vector<64x128xf32>
    %c25_i32 = arith.constant 25 : i32
    %73 = vector.broadcast %c25_i32 : i32 to vector<64x128xi32>
    %74 = arith.cmpi eq, %1, %73 : vector<64x128xi32>
    %c1_24 = arith.constant 1 : index
    %c3_25 = arith.constant 3 : index
    %75 = memref.load %arg0[%c1_24, %c3_25] : memref<2x8xi32, #tpu.memory_space<smem>>
    %76 = vector.broadcast %75 : i32 to vector<64x128xi32>
    %77 = arith.cmpi eq, %0, %76 : vector<64x128xi32>
    %78 = arith.andi %74, %77 : vector<64x128xi1>
    %cst_26 = arith.constant 1.000000e+00 : f32
    %cst_27 = arith.constant 0.000000e+00 : f32
    %79 = vector.broadcast %cst_26 : f32 to vector<64x128xf32>
    %80 = vector.broadcast %cst_27 : f32 to vector<64x128xf32>
    %81 = arith.select %78, %79, %80 : vector<64x128xi1>, vector<64x128xf32>
    %82 = arith.addf %72, %81 : vector<64x128xf32>
    %c32_i32 = arith.constant 32 : i32
    %83 = vector.broadcast %c32_i32 : i32 to vector<64x128xi32>
    %84 = arith.cmpi eq, %1, %83 : vector<64x128xi32>
    %c0_28 = arith.constant 0 : index
    %c4 = arith.constant 4 : index
    %85 = memref.load %arg0[%c0_28, %c4] : memref<2x8xi32, #tpu.memory_space<smem>>
    %86 = vector.broadcast %85 : i32 to vector<64x128xi32>
    %87 = arith.cmpi eq, %0, %86 : vector<64x128xi32>
    %88 = arith.andi %84, %87 : vector<64x128xi1>
    %cst_29 = arith.constant 1.000000e+00 : f32
    %cst_30 = arith.constant 0.000000e+00 : f32
    %89 = vector.broadcast %cst_29 : f32 to vector<64x128xf32>
    %90 = vector.broadcast %cst_30 : f32 to vector<64x128xf32>
    %91 = arith.select %88, %89, %90 : vector<64x128xi1>, vector<64x128xf32>
    %92 = arith.addf %82, %91 : vector<64x128xf32>
    %c33_i32 = arith.constant 33 : i32
    %93 = vector.broadcast %c33_i32 : i32 to vector<64x128xi32>
    %94 = arith.cmpi eq, %1, %93 : vector<64x128xi32>
    %c1_31 = arith.constant 1 : index
    %c4_32 = arith.constant 4 : index
    %95 = memref.load %arg0[%c1_31, %c4_32] : memref<2x8xi32, #tpu.memory_space<smem>>
    %96 = vector.broadcast %95 : i32 to vector<64x128xi32>
    %97 = arith.cmpi eq, %0, %96 : vector<64x128xi32>
    %98 = arith.andi %94, %97 : vector<64x128xi1>
    %cst_33 = arith.constant 1.000000e+00 : f32
    %cst_34 = arith.constant 0.000000e+00 : f32
    %99 = vector.broadcast %cst_33 : f32 to vector<64x128xf32>
    %100 = vector.broadcast %cst_34 : f32 to vector<64x128xf32>
    %101 = arith.select %98, %99, %100 : vector<64x128xi1>, vector<64x128xf32>
    %102 = arith.addf %92, %101 : vector<64x128xf32>
    %c40_i32 = arith.constant 40 : i32
    %103 = vector.broadcast %c40_i32 : i32 to vector<64x128xi32>
    %104 = arith.cmpi eq, %1, %103 : vector<64x128xi32>
    %c0_35 = arith.constant 0 : index
    %c5 = arith.constant 5 : index
    %105 = memref.load %arg0[%c0_35, %c5] : memref<2x8xi32, #tpu.memory_space<smem>>
    %106 = vector.broadcast %105 : i32 to vector<64x128xi32>
    %107 = arith.cmpi eq, %0, %106 : vector<64x128xi32>
    %108 = arith.andi %104, %107 : vector<64x128xi1>
    %cst_36 = arith.constant 1.000000e+00 : f32
    %cst_37 = arith.constant 0.000000e+00 : f32
    %109 = vector.broadcast %cst_36 : f32 to vector<64x128xf32>
    %110 = vector.broadcast %cst_37 : f32 to vector<64x128xf32>
    %111 = arith.select %108, %109, %110 : vector<64x128xi1>, vector<64x128xf32>
    %112 = arith.addf %102, %111 : vector<64x128xf32>
    %c41_i32 = arith.constant 41 : i32
    %113 = vector.broadcast %c41_i32 : i32 to vector<64x128xi32>
    %114 = arith.cmpi eq, %1, %113 : vector<64x128xi32>
    %c1_38 = arith.constant 1 : index
    %c5_39 = arith.constant 5 : index
    %115 = memref.load %arg0[%c1_38, %c5_39] : memref<2x8xi32, #tpu.memory_space<smem>>
    %116 = vector.broadcast %115 : i32 to vector<64x128xi32>
    %117 = arith.cmpi eq, %0, %116 : vector<64x128xi32>
    %118 = arith.andi %114, %117 : vector<64x128xi1>
    %cst_40 = arith.constant 1.000000e+00 : f32
    %cst_41 = arith.constant 0.000000e+00 : f32
    %119 = vector.broadcast %cst_40 : f32 to vector<64x128xf32>
    %120 = vector.broadcast %cst_41 : f32 to vector<64x128xf32>
    %121 = arith.select %118, %119, %120 : vector<64x128xi1>, vector<64x128xf32>
    %122 = arith.addf %112, %121 : vector<64x128xf32>
    %c48_i32 = arith.constant 48 : i32
    %123 = vector.broadcast %c48_i32 : i32 to vector<64x128xi32>
    %124 = arith.cmpi eq, %1, %123 : vector<64x128xi32>
    %c0_42 = arith.constant 0 : index
    %c6 = arith.constant 6 : index
    %125 = memref.load %arg0[%c0_42, %c6] : memref<2x8xi32, #tpu.memory_space<smem>>
    %126 = vector.broadcast %125 : i32 to vector<64x128xi32>
    %127 = arith.cmpi eq, %0, %126 : vector<64x128xi32>
    %128 = arith.andi %124, %127 : vector<64x128xi1>
    %cst_43 = arith.constant 1.000000e+00 : f32
    %cst_44 = arith.constant 0.000000e+00 : f32
    %129 = vector.broadcast %cst_43 : f32 to vector<64x128xf32>
    %130 = vector.broadcast %cst_44 : f32 to vector<64x128xf32>
    %131 = arith.select %128, %129, %130 : vector<64x128xi1>, vector<64x128xf32>
    %132 = arith.addf %122, %131 : vector<64x128xf32>
    %c49_i32 = arith.constant 49 : i32
    %133 = vector.broadcast %c49_i32 : i32 to vector<64x128xi32>
    %134 = arith.cmpi eq, %1, %133 : vector<64x128xi32>
    %c1_45 = arith.constant 1 : index
    %c6_46 = arith.constant 6 : index
    %135 = memref.load %arg0[%c1_45, %c6_46] : memref<2x8xi32, #tpu.memory_space<smem>>
    %136 = vector.broadcast %135 : i32 to vector<64x128xi32>
    %137 = arith.cmpi eq, %0, %136 : vector<64x128xi32>
    %138 = arith.andi %134, %137 : vector<64x128xi1>
    %cst_47 = arith.constant 1.000000e+00 : f32
    %cst_48 = arith.constant 0.000000e+00 : f32
    %139 = vector.broadcast %cst_47 : f32 to vector<64x128xf32>
    %140 = vector.broadcast %cst_48 : f32 to vector<64x128xf32>
    %141 = arith.select %138, %139, %140 : vector<64x128xi1>, vector<64x128xf32>
    %142 = arith.addf %132, %141 : vector<64x128xf32>
    %c56_i32 = arith.constant 56 : i32
    %143 = vector.broadcast %c56_i32 : i32 to vector<64x128xi32>
    %144 = arith.cmpi eq, %1, %143 : vector<64x128xi32>
    %c0_49 = arith.constant 0 : index
    %c7 = arith.constant 7 : index
    %145 = memref.load %arg0[%c0_49, %c7] : memref<2x8xi32, #tpu.memory_space<smem>>
    %146 = vector.broadcast %145 : i32 to vector<64x128xi32>
    %147 = arith.cmpi eq, %0, %146 : vector<64x128xi32>
    %148 = arith.andi %144, %147 : vector<64x128xi1>
    %cst_50 = arith.constant 1.000000e+00 : f32
    %cst_51 = arith.constant 0.000000e+00 : f32
    %149 = vector.broadcast %cst_50 : f32 to vector<64x128xf32>
    %150 = vector.broadcast %cst_51 : f32 to vector<64x128xf32>
    %151 = arith.select %148, %149, %150 : vector<64x128xi1>, vector<64x128xf32>
    %152 = arith.addf %142, %151 : vector<64x128xf32>
    %c57_i32 = arith.constant 57 : i32
    %153 = vector.broadcast %c57_i32 : i32 to vector<64x128xi32>
    %154 = arith.cmpi eq, %1, %153 : vector<64x128xi32>
    %c1_52 = arith.constant 1 : index
    %c7_53 = arith.constant 7 : index
    %155 = memref.load %arg0[%c1_52, %c7_53] : memref<2x8xi32, #tpu.memory_space<smem>>
    %156 = vector.broadcast %155 : i32 to vector<64x128xi32>
    %157 = arith.cmpi eq, %0, %156 : vector<64x128xi32>
    %158 = arith.andi %154, %157 : vector<64x128xi1>
    %cst_54 = arith.constant 1.000000e+00 : f32
    %cst_55 = arith.constant 0.000000e+00 : f32
    %159 = vector.broadcast %cst_54 : f32 to vector<64x128xf32>
    %160 = vector.broadcast %cst_55 : f32 to vector<64x128xf32>
    %161 = arith.select %158, %159, %160 : vector<64x128xi1>, vector<64x128xf32>
    %162 = arith.addf %152, %161 : vector<64x128xf32>
    %c0_56 = arith.constant 0 : index
    %c0_57 = arith.constant 0 : index
    %163 = vector.load %arg1[%c0_56, %c0_57] : memref<128x128xf32, #tpu.memory_space<vmem>>, vector<128x128xf32>
    %cst_58 = arith.constant dense<0.000000e+00> : vector<64x128xf32>
    %164 = tpu.matmul %162, %163, %cst_58 {dimension_numbers = #tpu.dot_dimension_numbers<[1], [0], [0], [1], [0, 0, 1, 1], [], []>} : vector<64x128xf32>, vector<128x128xf32>, vector<64x128xf32> -> vector<64x128xf32>
    %c0_59 = arith.constant 0 : index
    %c0_60 = arith.constant 0 : index
    %165 = vector.load %arg2[%c0_59, %c0_60] : memref<32x128xf32, #tpu.memory_space<vmem>>, vector<32x128xf32>
    %cst_61 = arith.constant 0.000000e+00 : f32
    %166 = vector.broadcast %cst_61 : f32 to vector<8x32xf32>
    %cst_62 = arith.constant 0.000000e+00 : f32
    %167 = vector.broadcast %cst_62 : f32 to vector<8x32xf32>
    %168 = vector.extract_strided_slice %164 {offsets = [0, 0], sizes = [8, 128], strides = [1, 1]} : vector<64x128xf32> to vector<8x128xf32>
    %cst_63 = arith.constant dense<0.000000e+00> : vector<8x128xf32>
    %169 = tpu.matmul %166, %165, %cst_63 {dimension_numbers = #tpu.dot_dimension_numbers<[1], [0], [0], [1], [0, 0, 1, 1], [], []>} : vector<8x32xf32>, vector<32x128xf32>, vector<8x128xf32> -> vector<8x128xf32>
    %170 = arith.addf %168, %169 : vector<8x128xf32>
    %cst_64 = arith.constant 5.000000e-01 : f32
    %171 = vector.broadcast %cst_64 : f32 to vector<8x128xf32>
    %172 = arith.mulf %171, %170 : vector<8x128xf32>
    %173 = math.tanh %172 : vector<8x128xf32>
    %cst_65 = arith.constant 1.000000e+00 : f32
    %174 = vector.broadcast %cst_65 : f32 to vector<8x128xf32>
    %175 = arith.addf %173, %174 : vector<8x128xf32>
    %cst_66 = arith.constant 5.000000e-01 : f32
    %176 = vector.broadcast %cst_66 : f32 to vector<8x128xf32>
    %177 = arith.mulf %176, %175 : vector<8x128xf32>
    %178 = vector.extract_strided_slice %177 {offsets = [0, 0], sizes = [8, 32], strides = [1, 1]} : vector<8x128xf32> to vector<8x32xf32>
    %179 = vector.extract_strided_slice %177 {offsets = [0, 32], sizes = [8, 32], strides = [1, 1]} : vector<8x128xf32> to vector<8x32xf32>
    %180 = vector.extract_strided_slice %170 {offsets = [0, 64], sizes = [8, 32], strides = [1, 1]} : vector<8x128xf32> to vector<8x32xf32>
    %181 = math.tanh %180 : vector<8x32xf32>
    %182 = vector.extract_strided_slice %177 {offsets = [0, 96], sizes = [8, 32], strides = [1, 1]} : vector<8x128xf32> to vector<8x32xf32>
    %183 = arith.mulf %179, %167 : vector<8x32xf32>
    %184 = arith.mulf %178, %181 : vector<8x32xf32>
    %185 = arith.addf %183, %184 : vector<8x32xf32>
    %186 = math.tanh %185 : vector<8x32xf32>
    %187 = arith.mulf %182, %186 : vector<8x32xf32>
    %188 = vector.extract_strided_slice %164 {offsets = [8, 0], sizes = [8, 128], strides = [1, 1]} : vector<64x128xf32> to vector<8x128xf32>
    %cst_67 = arith.constant dense<0.000000e+00> : vector<8x128xf32>
    %189 = tpu.matmul %187, %165, %cst_67 {dimension_numbers = #tpu.dot_dimension_numbers<[1], [0], [0], [1], [0, 0, 1, 1], [], []>} : vector<8x32xf32>, vector<32x128xf32>, vector<8x128xf32> -> vector<8x128xf32>
    %190 = arith.addf %188, %189 : vector<8x128xf32>
    %cst_68 = arith.constant 5.000000e-01 : f32
    %191 = vector.broadcast %cst_68 : f32 to vector<8x128xf32>
    %192 = arith.mulf %191, %190 : vector<8x128xf32>
    %193 = math.tanh %192 : vector<8x128xf32>
    %cst_69 = arith.constant 1.000000e+00 : f32
    %194 = vector.broadcast %cst_69 : f32 to vector<8x128xf32>
    %195 = arith.addf %193, %194 : vector<8x128xf32>
    %cst_70 = arith.constant 5.000000e-01 : f32
    %196 = vector.broadcast %cst_70 : f32 to vector<8x128xf32>
    %197 = arith.mulf %196, %195 : vector<8x128xf32>
    %198 = vector.extract_strided_slice %197 {offsets = [0, 0], sizes = [8, 32], strides = [1, 1]} : vector<8x128xf32> to vector<8x32xf32>
    %199 = vector.extract_strided_slice %197 {offsets = [0, 32], sizes = [8, 32], strides = [1, 1]} : vector<8x128xf32> to vector<8x32xf32>
    %200 = vector.extract_strided_slice %190 {offsets = [0, 64], sizes = [8, 32], strides = [1, 1]} : vector<8x128xf32> to vector<8x32xf32>
    %201 = math.tanh %200 : vector<8x32xf32>
    %202 = vector.extract_strided_slice %197 {offsets = [0, 96], sizes = [8, 32], strides = [1, 1]} : vector<8x128xf32> to vector<8x32xf32>
    %203 = arith.mulf %199, %185 : vector<8x32xf32>
    %204 = arith.mulf %198, %201 : vector<8x32xf32>
    %205 = arith.addf %203, %204 : vector<8x32xf32>
    %206 = math.tanh %205 : vector<8x32xf32>
    %207 = arith.mulf %202, %206 : vector<8x32xf32>
    %208 = vector.extract_strided_slice %164 {offsets = [16, 0], sizes = [8, 128], strides = [1, 1]} : vector<64x128xf32> to vector<8x128xf32>
    %cst_71 = arith.constant dense<0.000000e+00> : vector<8x128xf32>
    %209 = tpu.matmul %207, %165, %cst_71 {dimension_numbers = #tpu.dot_dimension_numbers<[1], [0], [0], [1], [0, 0, 1, 1], [], []>} : vector<8x32xf32>, vector<32x128xf32>, vector<8x128xf32> -> vector<8x128xf32>
    %210 = arith.addf %208, %209 : vector<8x128xf32>
    %cst_72 = arith.constant 5.000000e-01 : f32
    %211 = vector.broadcast %cst_72 : f32 to vector<8x128xf32>
    %212 = arith.mulf %211, %210 : vector<8x128xf32>
    %213 = math.tanh %212 : vector<8x128xf32>
    %cst_73 = arith.constant 1.000000e+00 : f32
    %214 = vector.broadcast %cst_73 : f32 to vector<8x128xf32>
    %215 = arith.addf %213, %214 : vector<8x128xf32>
    %cst_74 = arith.constant 5.000000e-01 : f32
    %216 = vector.broadcast %cst_74 : f32 to vector<8x128xf32>
    %217 = arith.mulf %216, %215 : vector<8x128xf32>
    %218 = vector.extract_strided_slice %217 {offsets = [0, 0], sizes = [8, 32], strides = [1, 1]} : vector<8x128xf32> to vector<8x32xf32>
    %219 = vector.extract_strided_slice %217 {offsets = [0, 32], sizes = [8, 32], strides = [1, 1]} : vector<8x128xf32> to vector<8x32xf32>
    %220 = vector.extract_strided_slice %210 {offsets = [0, 64], sizes = [8, 32], strides = [1, 1]} : vector<8x128xf32> to vector<8x32xf32>
    %221 = math.tanh %220 : vector<8x32xf32>
    %222 = vector.extract_strided_slice %217 {offsets = [0, 96], sizes = [8, 32], strides = [1, 1]} : vector<8x128xf32> to vector<8x32xf32>
    %223 = arith.mulf %219, %205 : vector<8x32xf32>
    %224 = arith.mulf %218, %221 : vector<8x32xf32>
    %225 = arith.addf %223, %224 : vector<8x32xf32>
    %226 = math.tanh %225 : vector<8x32xf32>
    %227 = arith.mulf %222, %226 : vector<8x32xf32>
    %228 = vector.extract_strided_slice %164 {offsets = [24, 0], sizes = [8, 128], strides = [1, 1]} : vector<64x128xf32> to vector<8x128xf32>
    %cst_75 = arith.constant dense<0.000000e+00> : vector<8x128xf32>
    %229 = tpu.matmul %227, %165, %cst_75 {dimension_numbers = #tpu.dot_dimension_numbers<[1], [0], [0], [1], [0, 0, 1, 1], [], []>} : vector<8x32xf32>, vector<32x128xf32>, vector<8x128xf32> -> vector<8x128xf32>
    %230 = arith.addf %228, %229 : vector<8x128xf32>
    %cst_76 = arith.constant 5.000000e-01 : f32
    %231 = vector.broadcast %cst_76 : f32 to vector<8x128xf32>
    %232 = arith.mulf %231, %230 : vector<8x128xf32>
    %233 = math.tanh %232 : vector<8x128xf32>
    %cst_77 = arith.constant 1.000000e+00 : f32
    %234 = vector.broadcast %cst_77 : f32 to vector<8x128xf32>
    %235 = arith.addf %233, %234 : vector<8x128xf32>
    %cst_78 = arith.constant 5.000000e-01 : f32
    %236 = vector.broadcast %cst_78 : f32 to vector<8x128xf32>
    %237 = arith.mulf %236, %235 : vector<8x128xf32>
    %238 = vector.extract_strided_slice %237 {offsets = [0, 0], sizes = [8, 32], strides = [1, 1]} : vector<8x128xf32> to vector<8x32xf32>
    %239 = vector.extract_strided_slice %237 {offsets = [0, 32], sizes = [8, 32], strides = [1, 1]} : vector<8x128xf32> to vector<8x32xf32>
    %240 = vector.extract_strided_slice %230 {offsets = [0, 64], sizes = [8, 32], strides = [1, 1]} : vector<8x128xf32> to vector<8x32xf32>
    %241 = math.tanh %240 : vector<8x32xf32>
    %242 = vector.extract_strided_slice %237 {offsets = [0, 96], sizes = [8, 32], strides = [1, 1]} : vector<8x128xf32> to vector<8x32xf32>
    %243 = arith.mulf %239, %225 : vector<8x32xf32>
    %244 = arith.mulf %238, %241 : vector<8x32xf32>
    %245 = arith.addf %243, %244 : vector<8x32xf32>
    %246 = math.tanh %245 : vector<8x32xf32>
    %247 = arith.mulf %242, %246 : vector<8x32xf32>
    %248 = vector.extract_strided_slice %164 {offsets = [32, 0], sizes = [8, 128], strides = [1, 1]} : vector<64x128xf32> to vector<8x128xf32>
    %cst_79 = arith.constant dense<0.000000e+00> : vector<8x128xf32>
    %249 = tpu.matmul %247, %165, %cst_79 {dimension_numbers = #tpu.dot_dimension_numbers<[1], [0], [0], [1], [0, 0, 1, 1], [], []>} : vector<8x32xf32>, vector<32x128xf32>, vector<8x128xf32> -> vector<8x128xf32>
    %250 = arith.addf %248, %249 : vector<8x128xf32>
    %cst_80 = arith.constant 5.000000e-01 : f32
    %251 = vector.broadcast %cst_80 : f32 to vector<8x128xf32>
    %252 = arith.mulf %251, %250 : vector<8x128xf32>
    %253 = math.tanh %252 : vector<8x128xf32>
    %cst_81 = arith.constant 1.000000e+00 : f32
    %254 = vector.broadcast %cst_81 : f32 to vector<8x128xf32>
    %255 = arith.addf %253, %254 : vector<8x128xf32>
    %cst_82 = arith.constant 5.000000e-01 : f32
    %256 = vector.broadcast %cst_82 : f32 to vector<8x128xf32>
    %257 = arith.mulf %256, %255 : vector<8x128xf32>
    %258 = vector.extract_strided_slice %257 {offsets = [0, 0], sizes = [8, 32], strides = [1, 1]} : vector<8x128xf32> to vector<8x32xf32>
    %259 = vector.extract_strided_slice %257 {offsets = [0, 32], sizes = [8, 32], strides = [1, 1]} : vector<8x128xf32> to vector<8x32xf32>
    %260 = vector.extract_strided_slice %250 {offsets = [0, 64], sizes = [8, 32], strides = [1, 1]} : vector<8x128xf32> to vector<8x32xf32>
    %261 = math.tanh %260 : vector<8x32xf32>
    %262 = vector.extract_strided_slice %257 {offsets = [0, 96], sizes = [8, 32], strides = [1, 1]} : vector<8x128xf32> to vector<8x32xf32>
    %263 = arith.mulf %259, %245 : vector<8x32xf32>
    %264 = arith.mulf %258, %261 : vector<8x32xf32>
    %265 = arith.addf %263, %264 : vector<8x32xf32>
    %266 = math.tanh %265 : vector<8x32xf32>
    %267 = arith.mulf %262, %266 : vector<8x32xf32>
    %268 = vector.extract_strided_slice %164 {offsets = [40, 0], sizes = [8, 128], strides = [1, 1]} : vector<64x128xf32> to vector<8x128xf32>
    %cst_83 = arith.constant dense<0.000000e+00> : vector<8x128xf32>
    %269 = tpu.matmul %267, %165, %cst_83 {dimension_numbers = #tpu.dot_dimension_numbers<[1], [0], [0], [1], [0, 0, 1, 1], [], []>} : vector<8x32xf32>, vector<32x128xf32>, vector<8x128xf32> -> vector<8x128xf32>
    %270 = arith.addf %268, %269 : vector<8x128xf32>
    %cst_84 = arith.constant 5.000000e-01 : f32
    %271 = vector.broadcast %cst_84 : f32 to vector<8x128xf32>
    %272 = arith.mulf %271, %270 : vector<8x128xf32>
    %273 = math.tanh %272 : vector<8x128xf32>
    %cst_85 = arith.constant 1.000000e+00 : f32
    %274 = vector.broadcast %cst_85 : f32 to vector<8x128xf32>
    %275 = arith.addf %273, %274 : vector<8x128xf32>
    %cst_86 = arith.constant 5.000000e-01 : f32
    %276 = vector.broadcast %cst_86 : f32 to vector<8x128xf32>
    %277 = arith.mulf %276, %275 : vector<8x128xf32>
    %278 = vector.extract_strided_slice %277 {offsets = [0, 0], sizes = [8, 32], strides = [1, 1]} : vector<8x128xf32> to vector<8x32xf32>
    %279 = vector.extract_strided_slice %277 {offsets = [0, 32], sizes = [8, 32], strides = [1, 1]} : vector<8x128xf32> to vector<8x32xf32>
    %280 = vector.extract_strided_slice %270 {offsets = [0, 64], sizes = [8, 32], strides = [1, 1]} : vector<8x128xf32> to vector<8x32xf32>
    %281 = math.tanh %280 : vector<8x32xf32>
    %282 = vector.extract_strided_slice %277 {offsets = [0, 96], sizes = [8, 32], strides = [1, 1]} : vector<8x128xf32> to vector<8x32xf32>
    %283 = arith.mulf %279, %265 : vector<8x32xf32>
    %284 = arith.mulf %278, %281 : vector<8x32xf32>
    %285 = arith.addf %283, %284 : vector<8x32xf32>
    %286 = math.tanh %285 : vector<8x32xf32>
    %287 = arith.mulf %282, %286 : vector<8x32xf32>
    %288 = vector.extract_strided_slice %164 {offsets = [48, 0], sizes = [8, 128], strides = [1, 1]} : vector<64x128xf32> to vector<8x128xf32>
    %cst_87 = arith.constant dense<0.000000e+00> : vector<8x128xf32>
    %289 = tpu.matmul %287, %165, %cst_87 {dimension_numbers = #tpu.dot_dimension_numbers<[1], [0], [0], [1], [0, 0, 1, 1], [], []>} : vector<8x32xf32>, vector<32x128xf32>, vector<8x128xf32> -> vector<8x128xf32>
    %290 = arith.addf %288, %289 : vector<8x128xf32>
    %cst_88 = arith.constant 5.000000e-01 : f32
    %291 = vector.broadcast %cst_88 : f32 to vector<8x128xf32>
    %292 = arith.mulf %291, %290 : vector<8x128xf32>
    %293 = math.tanh %292 : vector<8x128xf32>
    %cst_89 = arith.constant 1.000000e+00 : f32
    %294 = vector.broadcast %cst_89 : f32 to vector<8x128xf32>
    %295 = arith.addf %293, %294 : vector<8x128xf32>
    %cst_90 = arith.constant 5.000000e-01 : f32
    %296 = vector.broadcast %cst_90 : f32 to vector<8x128xf32>
    %297 = arith.mulf %296, %295 : vector<8x128xf32>
    %298 = vector.extract_strided_slice %297 {offsets = [0, 0], sizes = [8, 32], strides = [1, 1]} : vector<8x128xf32> to vector<8x32xf32>
    %299 = vector.extract_strided_slice %297 {offsets = [0, 32], sizes = [8, 32], strides = [1, 1]} : vector<8x128xf32> to vector<8x32xf32>
    %300 = vector.extract_strided_slice %290 {offsets = [0, 64], sizes = [8, 32], strides = [1, 1]} : vector<8x128xf32> to vector<8x32xf32>
    %301 = math.tanh %300 : vector<8x32xf32>
    %302 = vector.extract_strided_slice %297 {offsets = [0, 96], sizes = [8, 32], strides = [1, 1]} : vector<8x128xf32> to vector<8x32xf32>
    %303 = arith.mulf %299, %285 : vector<8x32xf32>
    %304 = arith.mulf %298, %301 : vector<8x32xf32>
    %305 = arith.addf %303, %304 : vector<8x32xf32>
    %306 = math.tanh %305 : vector<8x32xf32>
    %307 = arith.mulf %302, %306 : vector<8x32xf32>
    %308 = vector.extract_strided_slice %164 {offsets = [56, 0], sizes = [8, 128], strides = [1, 1]} : vector<64x128xf32> to vector<8x128xf32>
    %cst_91 = arith.constant dense<0.000000e+00> : vector<8x128xf32>
    %309 = tpu.matmul %307, %165, %cst_91 {dimension_numbers = #tpu.dot_dimension_numbers<[1], [0], [0], [1], [0, 0, 1, 1], [], []>} : vector<8x32xf32>, vector<32x128xf32>, vector<8x128xf32> -> vector<8x128xf32>
    %310 = arith.addf %308, %309 : vector<8x128xf32>
    %cst_92 = arith.constant 5.000000e-01 : f32
    %311 = vector.broadcast %cst_92 : f32 to vector<8x128xf32>
    %312 = arith.mulf %311, %310 : vector<8x128xf32>
    %313 = math.tanh %312 : vector<8x128xf32>
    %cst_93 = arith.constant 1.000000e+00 : f32
    %314 = vector.broadcast %cst_93 : f32 to vector<8x128xf32>
    %315 = arith.addf %313, %314 : vector<8x128xf32>
    %cst_94 = arith.constant 5.000000e-01 : f32
    %316 = vector.broadcast %cst_94 : f32 to vector<8x128xf32>
    %317 = arith.mulf %316, %315 : vector<8x128xf32>
    %318 = vector.extract_strided_slice %317 {offsets = [0, 0], sizes = [8, 32], strides = [1, 1]} : vector<8x128xf32> to vector<8x32xf32>
    %319 = vector.extract_strided_slice %317 {offsets = [0, 32], sizes = [8, 32], strides = [1, 1]} : vector<8x128xf32> to vector<8x32xf32>
    %320 = vector.extract_strided_slice %310 {offsets = [0, 64], sizes = [8, 32], strides = [1, 1]} : vector<8x128xf32> to vector<8x32xf32>
    %321 = math.tanh %320 : vector<8x32xf32>
    %322 = vector.extract_strided_slice %317 {offsets = [0, 96], sizes = [8, 32], strides = [1, 1]} : vector<8x128xf32> to vector<8x32xf32>
    %323 = arith.mulf %319, %305 : vector<8x32xf32>
    %324 = arith.mulf %318, %321 : vector<8x32xf32>
    %325 = arith.addf %323, %324 : vector<8x32xf32>
    %326 = math.tanh %325 : vector<8x32xf32>
    %327 = arith.mulf %322, %326 : vector<8x32xf32>
    %c0_95 = arith.constant 0 : index
    %c0_96 = arith.constant 0 : index
    %328 = vector.load %arg3[%c0_95, %c0_96] : memref<32x12xf32, #tpu.memory_space<vmem>>, vector<32x12xf32>
    %cst_97 = arith.constant dense<0.000000e+00> : vector<8x12xf32>
    %329 = tpu.matmul %327, %328, %cst_97 {dimension_numbers = #tpu.dot_dimension_numbers<[1], [0], [0], [1], [0, 0, 1, 1], [], []>} : vector<8x32xf32>, vector<32x12xf32>, vector<8x12xf32> -> vector<8x12xf32>
    %c0_98 = arith.constant 0 : index
    %c0_99 = arith.constant 0 : index
    %330 = vector.load %arg4[%c0_98, %c0_99] : memref<1x12xf32, #tpu.memory_space<vmem>>, vector<1x12xf32>
    %331 = vector.broadcast %330 : vector<1x12xf32> to vector<8x12xf32>
    %332 = arith.addf %329, %331 : vector<8x12xf32>
    %333 = vector.extract_strided_slice %332 {offsets = [0, 0], sizes = [2, 12], strides = [1, 1]} : vector<8x12xf32> to vector<2x12xf32>
    %c0_100 = arith.constant 0 : index
    %c0_101 = arith.constant 0 : index
    %334 = vector.load %arg5[%c0_100, %c0_101] : memref<2x12xf32, #tpu.memory_space<vmem>>, vector<2x12xf32>
    tpu.vector_store %arg5[%c0_100, %c0_101], %333 {strides = array<i32>} : memref<2x12xf32, #tpu.memory_space<vmem>>, vector<2x12xf32>,
    return
  }
}

</mosaic_0001>

<llo_original>
// kernel: tpu_custom_call.1
$region0: #{tpu_custom_call.1}
  #allocation0 [shape = 'u32[]', space=smem, size = 0x4, offset = 0x4, fixed_abs, tag = 'smem constant byte address 0x4 - core index']
  #allocation1 [shape = 'u32[144,128]{1,0:T(1,128)}', space=vmem, size = 0x12000, scoped, tag = 'internal scratch']
  %s0 = inlined_call_operand.vmem [shape: s32[2,8], index: 0, kind: input, shape index: {}]
  %s1 = inlined_call_operand.hbm [shape: f32[128,128], index: 1, kind: input, shape index: {}]
  %s2 = inlined_call_operand.vmem [shape: f32[32,128], index: 2, kind: input, shape index: {}]
  %s3 = inlined_call_operand.vmem [shape: f32[32,12], index: 3, kind: input, shape index: {}]
  %s4 = inlined_call_operand.vmem [shape: f32[1,12], index: 4, kind: input, shape index: {}]
  %s5 = inlined_call_operand.hbm [shape: f32[2,12], index: 5, kind: output, shape index: {}]
  %s6 = sld [smem:[#allocation0]]
  $region38: #{tpu_custom_call.1} parent=0
    _
  %s8 = ssub.s32 1, %s6
  %s9 = scalar_select 0, %s8, %s6
  $region1: #{tpu_custom_call.1} parent=0
    #allocation2 [shape = 'u8[1024]{0}', space=smem, size = 0x400, scoped, tag = 'input window, operand 0, single buffered']
    #allocation3 [shape = 's32[1]{0}', space=sflag, size = 0x4, scoped, tag = 'scoped memory for tpu_custom_call.1']
    #allocation4 [shape = 's32[1]{0}', space=sflag, size = 0x4, scoped, tag = 'scoped memory for tpu_custom_call.1']
    #allocation5 [shape = 's32[1]{0}', space=sflag, size = 0x4, scoped, tag = 'scoped memory for tpu_custom_call.1']
    #allocation6 [shape = 'u8[65536]{0}', space=vmem, size = 0x10000, scoped, tag = 'input window, operand 1, single buffered']
    #allocation7 [shape = 'u8[1024]{0}', space=vmem, size = 0x400, scoped, tag = 'output window, operand 0, single buffered']
    %10 = vsyncpa [#allocation5], 0
    %11 = vsyncpa [#allocation3], 0
    %12 = vsyncpa [#allocation4], 0
    // Predicated region
    $region2: #{tpu_custom_call.1} parent=1 // pred_check
      _
    $region3: #{tpu_custom_call.1} parent=1 // pred_check_branch
      %14 = sbr.rel (0) target = $region5
    $region4: #{tpu_custom_call.1} parent=1 // pred_region
      %s16 = ssub.s32 32, 32
      %17 = vsyncadd [#allocation5], %s16
      %s19 = sshll.u32 %s0, 4
      %s20 = int_to_ptr.vmem [resolvable:$true] %s19
      %22 = dma.vmem_to_smem %s20, 32, [#allocation2], [#allocation5]
    $region5: #{tpu_custom_call.1} parent=1 // pred_fallthru
      _
    // Predicated region
    $region6: #{tpu_custom_call.1} parent=1 // pred_check
      _
    $region7: #{tpu_custom_call.1} parent=1 // pred_check_branch
      %24 = sbr.rel (0) target = $region9
    $region8: #{tpu_custom_call.1} parent=1 // pred_region
      %s26 = ssub.s32 2048, 2048
      %27 = vsyncadd [#allocation3], %s26
      %s28 = sshll.u32 [#allocation6], 4
      %s29 = int_to_ptr.vmem [resolvable:$true] %s28
      %34 = dma.hbm_to_vmem [thread:$0]  %s1, 2048, %s29, [#allocation3], 128, 128, 8
    $region9: #{tpu_custom_call.1} parent=1 // pred_fallthru
      _
    // Predicated region
    $region10: #{tpu_custom_call.1} parent=1 // pred_check
      _
    $region11: #{tpu_custom_call.1} parent=1 // pred_check_branch
      %36 = sbr.rel (0) target = $region13
    $region12: #{tpu_custom_call.1} parent=1 // pred_region
      _
    $region13: #{tpu_custom_call.1} parent=1 // pred_fallthru
      _
    // Predicated region
    $region14: #{tpu_custom_call.1} parent=1 // pred_check
      _
    $region15: #{tpu_custom_call.1} parent=1 // pred_check_branch
      %38 = sbr.rel (0) target = $region17
    $region16: #{tpu_custom_call.1} parent=1 // pred_region
      _
    $region17: #{tpu_custom_call.1} parent=1 // pred_fallthru
      _
    // Predicated region
    $region18: #{tpu_custom_call.1} parent=1 // pred_check
      _
    $region19: #{tpu_custom_call.1} parent=1 // pred_check_branch
      %40 = sbr.rel (0) target = $region21
    $region20: #{tpu_custom_call.1} parent=1 // pred_region
      _
    $region21: #{tpu_custom_call.1} parent=1 // pred_fallthru
      _
    // Predicated region
    $region22: #{tpu_custom_call.1} parent=1 // pred_check
      _
    $region23: #{tpu_custom_call.1} parent=1 // pred_check_branch
      %42 = sbr.rel (0) target = $region25
    $region24: #{tpu_custom_call.1} parent=1 // pred_region
      %43 = dma.done [#allocation5], 32
    $region25: #{tpu_custom_call.1} parent=1 // pred_fallthru
      _
    // Predicated region
    $region26: #{tpu_custom_call.1} parent=1 // pred_check
      _
    $region27: #{tpu_custom_call.1} parent=1 // pred_check_branch
      %45 = sbr.rel (0) target = $region29
    $region28: #{tpu_custom_call.1} parent=1 // pred_region
      %46 = dma.done [#allocation3], 2048
    $region29: #{tpu_custom_call.1} parent=1 // pred_fallthru
      _
    %47 = sfence
    %v48 = vlaneseq
    %v49 = vand.u32 %v48, 127
    %v50 = vlaneseq
    %v51 = vshrl.u32 %v50, 7
    %v52 = vadd.s32 %v51, 8
    %v53 = vadd.s32 %v51, 16
    %v54 = vadd.s32 %v51, 24
    %v55 = vadd.s32 %v51, 32
    %v56 = vadd.s32 %v51, 40
    %v57 = vadd.s32 %v51, 48
    %v58 = vadd.s32 %v51, 56
    %vm59 = vcmp.eq.s32.totalorder %v51, 0
    %vm60 = vcmp.eq.s32.totalorder %v52, 0
    %vm61 = vcmp.eq.s32.totalorder %v53, 0
    %vm62 = vcmp.eq.s32.totalorder %v54, 0
    %vm63 = vcmp.eq.s32.totalorder %v55, 0
    %vm64 = vcmp.eq.s32.totalorder %v56, 0
    %vm65 = vcmp.eq.s32.totalorder %v57, 0
    %vm66 = vcmp.eq.s32.totalorder %v58, 0
    %s67 = sld [smem:[#allocation2]]
    %v68 = vstv %s67
    %vm69 = vcmp.eq.s32.totalorder %v49, %v68
    %vm70 = vmand %vm59, %vm69
    %vm71 = vmand %vm60, %vm69
    %vm72 = vmand %vm61, %vm69
    %vm73 = vmand %vm62, %vm69
    %vm74 = vmand %vm63, %vm69
    %vm75 = vmand %vm64, %vm69
    %vm76 = vmand %vm65, %vm69
    %vm77 = vmand %vm66, %vm69
    %v78 = vsel %vm70, 1.0, 0.0
    %v79 = vsel %vm71, 1.0, 0.0
    %v80 = vsel %vm72, 1.0, 0.0
    %v81 = vsel %vm73, 1.0, 0.0
    %v82 = vsel %vm74, 1.0, 0.0
    %v83 = vsel %vm75, 1.0, 0.0
    %v84 = vsel %vm76, 1.0, 0.0
    %v85 = vsel %vm77, 1.0, 0.0
    %v86 = vadd.f32 %v78, 0.0
    %v87 = vadd.f32 %v79, 0.0
    %v88 = vadd.f32 %v80, 0.0
    %v89 = vadd.f32 %v81, 0.0
    %v90 = vadd.f32 %v82, 0.0
    %v91 = vadd.f32 %v83, 0.0
    %v92 = vadd.f32 %v84, 0.0
    %v93 = vadd.f32 %v85, 0.0
    %vm94 = vcmp.eq.s32.totalorder %v51, 1
    %vm95 = vcmp.eq.s32.totalorder %v52, 1
    %vm96 = vcmp.eq.s32.totalorder %v53, 1
    %vm97 = vcmp.eq.s32.totalorder %v54, 1
    %vm98 = vcmp.eq.s32.totalorder %v55, 1
    %vm99 = vcmp.eq.s32.totalorder %v56, 1
    %vm100 = vcmp.eq.s32.totalorder %v57, 1
    %vm101 = vcmp.eq.s32.totalorder %v58, 1
    %s102 = sld [smem:[#allocation2 + $0x80]]
    %v103 = vstv %s102
    %vm104 = vcmp.eq.s32.totalorder %v49, %v103
    %vm105 = vmand %vm94, %vm104
    %vm106 = vmand %vm95, %vm104
    %vm107 = vmand %vm96, %vm104
    %vm108 = vmand %vm97, %vm104
    %vm109 = vmand %vm98, %vm104
    %vm110 = vmand %vm99, %vm104
    %vm111 = vmand %vm100, %vm104
    %vm112 = vmand %vm101, %vm104
    %v113 = vsel %vm105, 1.0, 0.0
    %v114 = vsel %vm106, 1.0, 0.0
    %v115 = vsel %vm107, 1.0, 0.0
    %v116 = vsel %vm108, 1.0, 0.0
    %v117 = vsel %vm109, 1.0, 0.0
    %v118 = vsel %vm110, 1.0, 0.0
    %v119 = vsel %vm111, 1.0, 0.0
    %v120 = vsel %vm112, 1.0, 0.0
    %v121 = vadd.f32 %v86, %v113
    %v122 = vadd.f32 %v87, %v114
    %v123 = vadd.f32 %v88, %v115
    %v124 = vadd.f32 %v89, %v116
    %v125 = vadd.f32 %v90, %v117
    %v126 = vadd.f32 %v91, %v118
    %v127 = vadd.f32 %v92, %v119
    %v128 = vadd.f32 %v93, %v120
    %vm129 = vcmp.eq.s32.totalorder %v51, 8
    %vm130 = vcmp.eq.s32.totalorder %v52, 8
    %vm131 = vcmp.eq.s32.totalorder %v53, 8
    %vm132 = vcmp.eq.s32.totalorder %v54, 8
    %vm133 = vcmp.eq.s32.totalorder %v55, 8
    %vm134 = vcmp.eq.s32.totalorder %v56, 8
    %vm135 = vcmp.eq.s32.totalorder %v57, 8
    %vm136 = vcmp.eq.s32.totalorder %v58, 8
    %s137 = sld [smem:[#allocation2 + $0x1]]
    %v138 = vstv %s137
    %vm139 = vcmp.eq.s32.totalorder %v49, %v138
    %vm140 = vmand %vm129, %vm139
    %vm141 = vmand %vm130, %vm139
    %vm142 = vmand %vm131, %vm139
    %vm143 = vmand %vm132, %vm139
    %vm144 = vmand %vm133, %vm139
    %vm145 = vmand %vm134, %vm139
    %vm146 = vmand %vm135, %vm139
    %vm147 = vmand %vm136, %vm139
    %v148 = vsel %vm140, 1.0, 0.0
    %v149 = vsel %vm141, 1.0, 0.0
    %v150 = vsel %vm142, 1.0, 0.0
    %v151 = vsel %vm143, 1.0, 0.0
    %v152 = vsel %vm144, 1.0, 0.0
    %v153 = vsel %vm145, 1.0, 0.0
    %v154 = vsel %vm146, 1.0, 0.0
    %v155 = vsel %vm147, 1.0, 0.0
    %v156 = vadd.f32 %v121, %v148
    %v157 = vadd.f32 %v122, %v149
    %v158 = vadd.f32 %v123, %v150
    %v159 = vadd.f32 %v124, %v151
    %v160 = vadd.f32 %v125, %v152
    %v161 = vadd.f32 %v126, %v153
    %v162 = vadd.f32 %v127, %v154
    %v163 = vadd.f32 %v128, %v155
    %vm164 = vcmp.eq.s32.totalorder %v51, 9
    %vm165 = vcmp.eq.s32.totalorder %v52, 9
    %vm166 = vcmp.eq.s32.totalorder %v53, 9
    %vm167 = vcmp.eq.s32.totalorder %v54, 9
    %vm168 = vcmp.eq.s32.totalorder %v55, 9
    %vm169 = vcmp.eq.s32.totalorder %v56, 9
    %vm170 = vcmp.eq.s32.totalorder %v57, 9
    %vm171 = vcmp.eq.s32.totalorder %v58, 9
    %s172 = sld [smem:[#allocation2 + $0x81]]
    %v173 = vstv %s172
    %vm174 = vcmp.eq.s32.totalorder %v49, %v173
    %vm175 = vmand %vm164, %vm174
    %vm176 = vmand %vm165, %vm174
    %vm177 = vmand %vm166, %vm174
    %vm178 = vmand %vm167, %vm174
    %vm179 = vmand %vm168, %vm174
    %vm180 = vmand %vm169, %vm174
    %vm181 = vmand %vm170, %vm174
    %vm182 = vmand %vm171, %vm174
    %v183 = vsel %vm175, 1.0, 0.0
    %v184 = vsel %vm176, 1.0, 0.0
    %v185 = vsel %vm177, 1.0, 0.0
    %v186 = vsel %vm178, 1.0, 0.0
    %v187 = vsel %vm179, 1.0, 0.0
    %v188 = vsel %vm180, 1.0, 0.0
    %v189 = vsel %vm181, 1.0, 0.0
    %v190 = vsel %vm182, 1.0, 0.0
    %v191 = vadd.f32 %v156, %v183
    %v192 = vadd.f32 %v157, %v184
    %v193 = vadd.f32 %v158, %v185
    %v194 = vadd.f32 %v159, %v186
    %v195 = vadd.f32 %v160, %v187
    %v196 = vadd.f32 %v161, %v188
    %v197 = vadd.f32 %v162, %v189
    %v198 = vadd.f32 %v163, %v190
    %vm199 = vcmp.eq.s32.totalorder %v51, 16
    %vm200 = vcmp.eq.s32.totalorder %v52, 16
    %vm201 = vcmp.eq.s32.totalorder %v53, 16
    %vm202 = vcmp.eq.s32.totalorder %v54, 16
    %vm203 = vcmp.eq.s32.totalorder %v55, 16
    %vm204 = vcmp.eq.s32.totalorder %v56, 16
    %vm205 = vcmp.eq.s32.totalorder %v57, 16
    %vm206 = vcmp.eq.s32.totalorder %v58, 16
    %s207 = sld [smem:[#allocation2 + $0x2]]
    %v208 = vstv %s207
    %vm209 = vcmp.eq.s32.totalorder %v49, %v208
    %vm210 = vmand %vm199, %vm209
    %vm211 = vmand %vm200, %vm209
    %vm212 = vmand %vm201, %vm209
    %vm213 = vmand %vm202, %vm209
    %vm214 = vmand %vm203, %vm209
    %vm215 = vmand %vm204, %vm209
    %vm216 = vmand %vm205, %vm209
    %vm217 = vmand %vm206, %vm209
    %v218 = vsel %vm210, 1.0, 0.0
    %v219 = vsel %vm211, 1.0, 0.0
    %v220 = vsel %vm212, 1.0, 0.0
    %v221 = vsel %vm213, 1.0, 0.0
    %v222 = vsel %vm214, 1.0, 0.0
    %v223 = vsel %vm215, 1.0, 0.0
    %v224 = vsel %vm216, 1.0, 0.0
    %v225 = vsel %vm217, 1.0, 0.0
    %v226 = vadd.f32 %v191, %v218
    %v227 = vadd.f32 %v192, %v219
    %v228 = vadd.f32 %v193, %v220
    %v229 = vadd.f32 %v194, %v221
    %v230 = vadd.f32 %v195, %v222
    %v231 = vadd.f32 %v196, %v223
    %v232 = vadd.f32 %v197, %v224
    %v233 = vadd.f32 %v198, %v225
    %vm234 = vcmp.eq.s32.totalorder %v51, 17
    %vm235 = vcmp.eq.s32.totalorder %v52, 17
    %vm236 = vcmp.eq.s32.totalorder %v53, 17
    %vm237 = vcmp.eq.s32.totalorder %v54, 17
    %vm238 = vcmp.eq.s32.totalorder %v55, 17
    %vm239 = vcmp.eq.s32.totalorder %v56, 17
    %vm240 = vcmp.eq.s32.totalorder %v57, 17
    %vm241 = vcmp.eq.s32.totalorder %v58, 17
    %s242 = sld [smem:[#allocation2 + $0x82]]
    %v243 = vstv %s242
    %vm244 = vcmp.eq.s32.totalorder %v49, %v243
    %vm245 = vmand %vm234, %vm244
    %vm246 = vmand %vm235, %vm244
    %vm247 = vmand %vm236, %vm244
    %vm248 = vmand %vm237, %vm244
    %vm249 = vmand %vm238, %vm244
    %vm250 = vmand %vm239, %vm244
    %vm251 = vmand %vm240, %vm244
    %vm252 = vmand %vm241, %vm244
    %v253 = vsel %vm245, 1.0, 0.0
    %v254 = vsel %vm246, 1.0, 0.0
    %v255 = vsel %vm247, 1.0, 0.0
    %v256 = vsel %vm248, 1.0, 0.0
    %v257 = vsel %vm249, 1.0, 0.0
    %v258 = vsel %vm250, 1.0, 0.0
    %v259 = vsel %vm251, 1.0, 0.0
    %v260 = vsel %vm252, 1.0, 0.0
    %v261 = vadd.f32 %v226, %v253
    %v262 = vadd.f32 %v227, %v254
    %v263 = vadd.f32 %v228, %v255
    %v264 = vadd.f32 %v229, %v256
    %v265 = vadd.f32 %v230, %v257
    %v266 = vadd.f32 %v231, %v258
    %v267 = vadd.f32 %v232, %v259
    %v268 = vadd.f32 %v233, %v260
    %vm269 = vcmp.eq.s32.totalorder %v51, 24
    %vm270 = vcmp.eq.s32.totalorder %v52, 24
    %vm271 = vcmp.eq.s32.totalorder %v53, 24
    %vm272 = vcmp.eq.s32.totalorder %v54, 24
    %vm273 = vcmp.eq.s32.totalorder %v55, 24
    %vm274 = vcmp.eq.s32.totalorder %v56, 24
    %vm275 = vcmp.eq.s32.totalorder %v57, 24
    %vm276 = vcmp.eq.s32.totalorder %v58, 24
    %s277 = sld [smem:[#allocation2 + $0x3]]
    %v278 = vstv %s277
    %vm279 = vcmp.eq.s32.totalorder %v49, %v278
    %vm280 = vmand %vm269, %vm279
    %vm281 = vmand %vm270, %vm279
    %vm282 = vmand %vm271, %vm279
    %vm283 = vmand %vm272, %vm279
    %vm284 = vmand %vm273, %vm279
    %vm285 = vmand %vm274, %vm279
    %vm286 = vmand %vm275, %vm279
    %vm287 = vmand %vm276, %vm279
    %v288 = vsel %vm280, 1.0, 0.0
    %v289 = vsel %vm281, 1.0, 0.0
    %v290 = vsel %vm282, 1.0, 0.0
    %v291 = vsel %vm283, 1.0, 0.0
    %v292 = vsel %vm284, 1.0, 0.0
    %v293 = vsel %vm285, 1.0, 0.0
    %v294 = vsel %vm286, 1.0, 0.0
    %v295 = vsel %vm287, 1.0, 0.0
    %v296 = vadd.f32 %v261, %v288
    %v297 = vadd.f32 %v262, %v289
    %v298 = vadd.f32 %v263, %v290
    %v299 = vadd.f32 %v264, %v291
    %v300 = vadd.f32 %v265, %v292
    %v301 = vadd.f32 %v266, %v293
    %v302 = vadd.f32 %v267, %v294
    %v303 = vadd.f32 %v268, %v295
    %vm304 = vcmp.eq.s32.totalorder %v51, 25
    %vm305 = vcmp.eq.s32.totalorder %v52, 25
    %vm306 = vcmp.eq.s32.totalorder %v53, 25
    %vm307 = vcmp.eq.s32.totalorder %v54, 25
    %vm308 = vcmp.eq.s32.totalorder %v55, 25
    %vm309 = vcmp.eq.s32.totalorder %v56, 25
    %vm310 = vcmp.eq.s32.totalorder %v57, 25
    %vm311 = vcmp.eq.s32.totalorder %v58, 25
    %s312 = sld [smem:[#allocation2 + $0x83]]
    %v313 = vstv %s312
    %vm314 = vcmp.eq.s32.totalorder %v49, %v313
    %vm315 = vmand %vm304, %vm314
    %vm316 = vmand %vm305, %vm314
    %vm317 = vmand %vm306, %vm314
    %vm318 = vmand %vm307, %vm314
    %vm319 = vmand %vm308, %vm314
    %vm320 = vmand %vm309, %vm314
    %vm321 = vmand %vm310, %vm314
    %vm322 = vmand %vm311, %vm314
    %v323 = vsel %vm315, 1.0, 0.0
    %v324 = vsel %vm316, 1.0, 0.0
    %v325 = vsel %vm317, 1.0, 0.0
    %v326 = vsel %vm318, 1.0, 0.0
    %v327 = vsel %vm319, 1.0, 0.0
    %v328 = vsel %vm320, 1.0, 0.0
    %v329 = vsel %vm321, 1.0, 0.0
    %v330 = vsel %vm322, 1.0, 0.0
    %v331 = vadd.f32 %v296, %v323
    %v332 = vadd.f32 %v297, %v324
    %v333 = vadd.f32 %v298, %v325
    %v334 = vadd.f32 %v299, %v326
    %v335 = vadd.f32 %v300, %v327
    %v336 = vadd.f32 %v301, %v328
    %v337 = vadd.f32 %v302, %v329
    %v338 = vadd.f32 %v303, %v330
    %vm339 = vcmp.eq.s32.totalorder %v51, 32
    %vm340 = vcmp.eq.s32.totalorder %v52, 32
    %vm341 = vcmp.eq.s32.totalorder %v53, 32
    %vm342 = vcmp.eq.s32.totalorder %v54, 32
    %vm343 = vcmp.eq.s32.totalorder %v55, 32
    %vm344 = vcmp.eq.s32.totalorder %v56, 32
    %vm345 = vcmp.eq.s32.totalorder %v57, 32
    %vm346 = vcmp.eq.s32.totalorder %v58, 32
    %s347 = sld [smem:[#allocation2 + $0x4]]
    %v348 = vstv %s347
    %vm349 = vcmp.eq.s32.totalorder %v49, %v348
    %vm350 = vmand %vm339, %vm349
    %vm351 = vmand %vm340, %vm349
    %vm352 = vmand %vm341, %vm349
    %vm353 = vmand %vm342, %vm349
    %vm354 = vmand %vm343, %vm349
    %vm355 = vmand %vm344, %vm349
    %vm356 = vmand %vm345, %vm349
    %vm357 = vmand %vm346, %vm349
    %v358 = vsel %vm350, 1.0, 0.0
    %v359 = vsel %vm351, 1.0, 0.0
    %v360 = vsel %vm352, 1.0, 0.0
    %v361 = vsel %vm353, 1.0, 0.0
    %v362 = vsel %vm354, 1.0, 0.0
    %v363 = vsel %vm355, 1.0, 0.0
    %v364 = vsel %vm356, 1.0, 0.0
    %v365 = vsel %vm357, 1.0, 0.0
    %v366 = vadd.f32 %v331, %v358
    %v367 = vadd.f32 %v332, %v359
    %v368 = vadd.f32 %v333, %v360
    %v369 = vadd.f32 %v334, %v361
    %v370 = vadd.f32 %v335, %v362
    %v371 = vadd.f32 %v336, %v363
    %v372 = vadd.f32 %v337, %v364
    %v373 = vadd.f32 %v338, %v365
    %vm374 = vcmp.eq.s32.totalorder %v51, 33
    %vm375 = vcmp.eq.s32.totalorder %v52, 33
    %vm376 = vcmp.eq.s32.totalorder %v53, 33
    %vm377 = vcmp.eq.s32.totalorder %v54, 33
    %vm378 = vcmp.eq.s32.totalorder %v55, 33
    %vm379 = vcmp.eq.s32.totalorder %v56, 33
    %vm380 = vcmp.eq.s32.totalorder %v57, 33
    %vm381 = vcmp.eq.s32.totalorder %v58, 33
    %s382 = sld [smem:[#allocation2 + $0x84]]
    %v383 = vstv %s382
    %vm384 = vcmp.eq.s32.totalorder %v49, %v383
    %vm385 = vmand %vm374, %vm384
    %vm386 = vmand %vm375, %vm384
    %vm387 = vmand %vm376, %vm384
    %vm388 = vmand %vm377, %vm384
    %vm389 = vmand %vm378, %vm384
    %vm390 = vmand %vm379, %vm384
    %vm391 = vmand %vm380, %vm384
    %vm392 = vmand %vm381, %vm384
    %v393 = vsel %vm385, 1.0, 0.0
    %v394 = vsel %vm386, 1.0, 0.0
    %v395 = vsel %vm387, 1.0, 0.0
    %v396 = vsel %vm388, 1.0, 0.0
    %v397 = vsel %vm389, 1.0, 0.0
    %v398 = vsel %vm390, 1.0, 0.0
    %v399 = vsel %vm391, 1.0, 0.0
    %v400 = vsel %vm392, 1.0, 0.0
    %v401 = vadd.f32 %v366, %v393
    %v402 = vadd.f32 %v367, %v394
    %v403 = vadd.f32 %v368, %v395
    %v404 = vadd.f32 %v369, %v396
    %v405 = vadd.f32 %v370, %v397
    %v406 = vadd.f32 %v371, %v398
    %v407 = vadd.f32 %v372, %v399
    %v408 = vadd.f32 %v373, %v400
    %vm409 = vcmp.eq.s32.totalorder %v51, 40
    %vm410 = vcmp.eq.s32.totalorder %v52, 40
    %vm411 = vcmp.eq.s32.totalorder %v53, 40
    %vm412 = vcmp.eq.s32.totalorder %v54, 40
    %vm413 = vcmp.eq.s32.totalorder %v55, 40
    %vm414 = vcmp.eq.s32.totalorder %v56, 40
    %vm415 = vcmp.eq.s32.totalorder %v57, 40
    %vm416 = vcmp.eq.s32.totalorder %v58, 40
    %s417 = sld [smem:[#allocation2 + $0x5]]
    %v418 = vstv %s417
    %vm419 = vcmp.eq.s32.totalorder %v49, %v418
    %vm420 = vmand %vm409, %vm419
    %vm421 = vmand %vm410, %vm419
    %vm422 = vmand %vm411, %vm419
    %vm423 = vmand %vm412, %vm419
    %vm424 = vmand %vm413, %vm419
    %vm425 = vmand %vm414, %vm419
    %vm426 = vmand %vm415, %vm419
    %vm427 = vmand %vm416, %vm419
    %v428 = vsel %vm420, 1.0, 0.0
    %v429 = vsel %vm421, 1.0, 0.0
    %v430 = vsel %vm422, 1.0, 0.0
    %v431 = vsel %vm423, 1.0, 0.0
    %v432 = vsel %vm424, 1.0, 0.0
    %v433 = vsel %vm425, 1.0, 0.0
    %v434 = vsel %vm426, 1.0, 0.0
    %v435 = vsel %vm427, 1.0, 0.0
    %v436 = vadd.f32 %v401, %v428
    %v437 = vadd.f32 %v402, %v429
    %v438 = vadd.f32 %v403, %v430
    %v439 = vadd.f32 %v404, %v431
    %v440 = vadd.f32 %v405, %v432
    %v441 = vadd.f32 %v406, %v433
    %v442 = vadd.f32 %v407, %v434
    %v443 = vadd.f32 %v408, %v435
    %vm444 = vcmp.eq.s32.totalorder %v51, 41
    %vm445 = vcmp.eq.s32.totalorder %v52, 41
    %vm446 = vcmp.eq.s32.totalorder %v53, 41
    %vm447 = vcmp.eq.s32.totalorder %v54, 41
    %vm448 = vcmp.eq.s32.totalorder %v55, 41
    %vm449 = vcmp.eq.s32.totalorder %v56, 41
    %vm450 = vcmp.eq.s32.totalorder %v57, 41
    %vm451 = vcmp.eq.s32.totalorder %v58, 41
    %s452 = sld [smem:[#allocation2 + $0x85]]
    %v453 = vstv %s452
    %vm454 = vcmp.eq.s32.totalorder %v49, %v453
    %vm455 = vmand %vm444, %vm454
    %vm456 = vmand %vm445, %vm454
    %vm457 = vmand %vm446, %vm454
    %vm458 = vmand %vm447, %vm454
    %vm459 = vmand %vm448, %vm454
    %vm460 = vmand %vm449, %vm454
    %vm461 = vmand %vm450, %vm454
    %vm462 = vmand %vm451, %vm454
    %v463 = vsel %vm455, 1.0, 0.0
    %v464 = vsel %vm456, 1.0, 0.0
    %v465 = vsel %vm457, 1.0, 0.0
    %v466 = vsel %vm458, 1.0, 0.0
    %v467 = vsel %vm459, 1.0, 0.0
    %v468 = vsel %vm460, 1.0, 0.0
    %v469 = vsel %vm461, 1.0, 0.0
    %v470 = vsel %vm462, 1.0, 0.0
    %v471 = vadd.f32 %v436, %v463
    %v472 = vadd.f32 %v437, %v464
    %v473 = vadd.f32 %v438, %v465
    %v474 = vadd.f32 %v439, %v466
    %v475 = vadd.f32 %v440, %v467
    %v476 = vadd.f32 %v441, %v468
    %v477 = vadd.f32 %v442, %v469
    %v478 = vadd.f32 %v443, %v470
    %vm479 = vcmp.eq.s32.totalorder %v51, 48
    %vm480 = vcmp.eq.s32.totalorder %v52, 48
    %vm481 = vcmp.eq.s32.totalorder %v53, 48
    %vm482 = vcmp.eq.s32.totalorder %v54, 48
    %vm483 = vcmp.eq.s32.totalorder %v55, 48
    %vm484 = vcmp.eq.s32.totalorder %v56, 48
    %vm485 = vcmp.eq.s32.totalorder %v57, 48
    %vm486 = vcmp.eq.s32.totalorder %v58, 48
    %s487 = sld [smem:[#allocation2 + $0x6]]
    %v488 = vstv %s487
    %vm489 = vcmp.eq.s32.totalorder %v49, %v488
    %vm490 = vmand %vm479, %vm489
    %vm491 = vmand %vm480, %vm489
    %vm492 = vmand %vm481, %vm489
    %vm493 = vmand %vm482, %vm489
    %vm494 = vmand %vm483, %vm489
    %vm495 = vmand %vm484, %vm489
    %vm496 = vmand %vm485, %vm489
    %vm497 = vmand %vm486, %vm489
    %v498 = vsel %vm490, 1.0, 0.0
    %v499 = vsel %vm491, 1.0, 0.0
    %v500 = vsel %vm492, 1.0, 0.0
    %v501 = vsel %vm493, 1.0, 0.0
    %v502 = vsel %vm494, 1.0, 0.0
    %v503 = vsel %vm495, 1.0, 0.0
    %v504 = vsel %vm496, 1.0, 0.0
    %v505 = vsel %vm497, 1.0, 0.0
    %v506 = vadd.f32 %v471, %v498
    %v507 = vadd.f32 %v472, %v499
    %v508 = vadd.f32 %v473, %v500
    %v509 = vadd.f32 %v474, %v501
    %v510 = vadd.f32 %v475, %v502
    %v511 = vadd.f32 %v476, %v503
    %v512 = vadd.f32 %v477, %v504
    %v513 = vadd.f32 %v478, %v505
    %vm514 = vcmp.eq.s32.totalorder %v51, 49
    %vm515 = vcmp.eq.s32.totalorder %v52, 49
    %vm516 = vcmp.eq.s32.totalorder %v53, 49
    %vm517 = vcmp.eq.s32.totalorder %v54, 49
    %vm518 = vcmp.eq.s32.totalorder %v55, 49
    %vm519 = vcmp.eq.s32.totalorder %v56, 49
    %vm520 = vcmp.eq.s32.totalorder %v57, 49
    %vm521 = vcmp.eq.s32.totalorder %v58, 49
    %s522 = sld [smem:[#allocation2 + $0x86]]
    %v523 = vstv %s522
    %vm524 = vcmp.eq.s32.totalorder %v49, %v523
    %vm525 = vmand %vm514, %vm524
    %vm526 = vmand %vm515, %vm524
    %vm527 = vmand %vm516, %vm524
    %vm528 = vmand %vm517, %vm524
    %vm529 = vmand %vm518, %vm524
    %vm530 = vmand %vm519, %vm524
    %vm531 = vmand %vm520, %vm524
    %vm532 = vmand %vm521, %vm524
    %v533 = vsel %vm525, 1.0, 0.0
    %v534 = vsel %vm526, 1.0, 0.0
    %v535 = vsel %vm527, 1.0, 0.0
    %v536 = vsel %vm528, 1.0, 0.0
    %v537 = vsel %vm529, 1.0, 0.0
    %v538 = vsel %vm530, 1.0, 0.0
    %v539 = vsel %vm531, 1.0, 0.0
    %v540 = vsel %vm532, 1.0, 0.0
    %v541 = vadd.f32 %v506, %v533
    %v542 = vadd.f32 %v507, %v534
    %v543 = vadd.f32 %v508, %v535
    %v544 = vadd.f32 %v509, %v536
    %v545 = vadd.f32 %v510, %v537
    %v546 = vadd.f32 %v511, %v538
    %v547 = vadd.f32 %v512, %v539
    %v548 = vadd.f32 %v513, %v540
    %vm549 = vcmp.eq.s32.totalorder %v51, 56
    %vm550 = vcmp.eq.s32.totalorder %v52, 56
    %vm551 = vcmp.eq.s32.totalorder %v53, 56
    %vm552 = vcmp.eq.s32.totalorder %v54, 56
    %vm553 = vcmp.eq.s32.totalorder %v55, 56
    %vm554 = vcmp.eq.s32.totalorder %v56, 56
    %vm555 = vcmp.eq.s32.totalorder %v57, 56
    %vm556 = vcmp.eq.s32.totalorder %v58, 56
    %s557 = sld [smem:[#allocation2 + $0x7]]
    %v558 = vstv %s557
    %vm559 = vcmp.eq.s32.totalorder %v49, %v558
    %vm560 = vmand %vm549, %vm559
    %vm561 = vmand %vm550, %vm559
    %vm562 = vmand %vm551, %vm559
    %vm563 = vmand %vm552, %vm559
    %vm564 = vmand %vm553, %vm559
    %vm565 = vmand %vm554, %vm559
    %vm566 = vmand %vm555, %vm559
    %vm567 = vmand %vm556, %vm559
    %v568 = vsel %vm560, 1.0, 0.0
    %v569 = vsel %vm561, 1.0, 0.0
    %v570 = vsel %vm562, 1.0, 0.0
    %v571 = vsel %vm563, 1.0, 0.0
    %v572 = vsel %vm564, 1.0, 0.0
    %v573 = vsel %vm565, 1.0, 0.0
    %v574 = vsel %vm566, 1.0, 0.0
    %v575 = vsel %vm567, 1.0, 0.0
    %v576 = vadd.f32 %v541, %v568
    %v577 = vadd.f32 %v542, %v569
    %v578 = vadd.f32 %v543, %v570
    %v579 = vadd.f32 %v544, %v571
    %v580 = vadd.f32 %v545, %v572
    %v581 = vadd.f32 %v546, %v573
    %v582 = vadd.f32 %v547, %v574
    %v583 = vadd.f32 %v548, %v575
    %vm584 = vcmp.eq.s32.totalorder %v51, 57
    %vm585 = vcmp.eq.s32.totalorder %v52, 57
    %vm586 = vcmp.eq.s32.totalorder %v53, 57
    %vm587 = vcmp.eq.s32.totalorder %v54, 57
    %vm588 = vcmp.eq.s32.totalorder %v55, 57
    %vm589 = vcmp.eq.s32.totalorder %v56, 57
    %vm590 = vcmp.eq.s32.totalorder %v57, 57
    %vm591 = vcmp.eq.s32.totalorder %v58, 57
    %s592 = sld [smem:[#allocation2 + $0x87]]
    %v593 = vstv %s592
    %vm594 = vcmp.eq.s32.totalorder %v49, %v593
    %vm595 = vmand %vm584, %vm594
    %vm596 = vmand %vm585, %vm594
    %vm597 = vmand %vm586, %vm594
    %vm598 = vmand %vm587, %vm594
    %vm599 = vmand %vm588, %vm594
    %vm600 = vmand %vm589, %vm594
    %vm601 = vmand %vm590, %vm594
    %vm602 = vmand %vm591, %vm594
    %v603 = vsel %vm595, 1.0, 0.0
    %v604 = vsel %vm596, 1.0, 0.0
    %v605 = vsel %vm597, 1.0, 0.0
    %v606 = vsel %vm598, 1.0, 0.0
    %v607 = vsel %vm599, 1.0, 0.0
    %v608 = vsel %vm600, 1.0, 0.0
    %v609 = vsel %vm601, 1.0, 0.0
    %v610 = vsel %vm602, 1.0, 0.0
    %v611 = vadd.f32 %v576, %v603
    %v612 = vadd.f32 %v577, %v604
    %v613 = vadd.f32 %v578, %v605
    %v614 = vadd.f32 %v579, %v606
    %v615 = vadd.f32 %v580, %v607
    %v616 = vadd.f32 %v581, %v608
    %v617 = vadd.f32 %v582, %v609
    %v618 = vadd.f32 %v583, %v610
    %v619 = vld [vmem:[#allocation6] sm:$0xff]
    %v620 = vld [vmem:[#allocation6 + $0x8] sm:$0xff]
    %v621 = vld [vmem:[#allocation6 + $0x10] sm:$0xff]
    %v622 = vld [vmem:[#allocation6 + $0x18] sm:$0xff]
    %v623 = vld [vmem:[#allocation6 + $0x20] sm:$0xff]
    %v624 = vld [vmem:[#allocation6 + $0x28] sm:$0xff]
    %v625 = vld [vmem:[#allocation6 + $0x30] sm:$0xff]
    %v626 = vld [vmem:[#allocation6 + $0x38] sm:$0xff]
    %v627 = vld [vmem:[#allocation6 + $0x40] sm:$0xff]
    %v628 = vld [vmem:[#allocation6 + $0x48] sm:$0xff]
    %v629 = vld [vmem:[#allocation6 + $0x50] sm:$0xff]
    %v630 = vld [vmem:[#allocation6 + $0x58] sm:$0xff]
    %v631 = vld [vmem:[#allocation6 + $0x60] sm:$0xff]
    %v632 = vld [vmem:[#allocation6 + $0x68] sm:$0xff]
    %v633 = vld [vmem:[#allocation6 + $0x70] sm:$0xff]
    %v634 = vld [vmem:[#allocation6 + $0x78] sm:$0xff]
    %635 = vmatprep.subr.mxu0 0.0
    %636 = vmatpush1.msra.mxu0 %v619
    %637 = vmatprep.subr.mxu0 0.0
    %638 = vmatpush1.msra.mxu0 %v620
    %639 = vmatprep.subr.mxu0 0.0
    %640 = vmatpush1.msra.mxu0 %v621
    %641 = vmatprep.subr.mxu0 0.0
    %642 = vmatpush1.msra.mxu0 %v622
    %643 = vmatprep.subr.mxu0 0.0
    %644 = vmatpush1.msra.mxu0 %v623
    %645 = vmatprep.subr.mxu0 0.0
    %646 = vmatpush1.msra.mxu0 %v624
    %647 = vmatprep.subr.mxu0 0.0
    %648 = vmatpush1.msra.mxu0 %v625
    %649 = vmatprep.subr.mxu0 0.0
    %650 = vmatpush1.msra.mxu0 %v626
    %651 = vmatprep.subr.mxu0 0.0
    %652 = vmatpush1.msra.mxu0 %v627
    %653 = vmatprep.subr.mxu0 0.0
    %654 = vmatpush1.msra.mxu0 %v628
    %655 = vmatprep.subr.mxu0 0.0
    %656 = vmatpush1.msra.mxu0 %v629
    %657 = vmatprep.subr.mxu0 0.0
    %658 = vmatpush1.msra.mxu0 %v630
    %659 = vmatprep.subr.mxu0 0.0
    %660 = vmatpush1.msra.mxu0 %v631
    %661 = vmatprep.subr.mxu0 0.0
    %662 = vmatpush1.msra.mxu0 %v632
    %663 = vmatprep.subr.mxu0 0.0
    %664 = vmatpush1.msra.mxu0 %v633
    %665 = vmatprep.subr.mxu0 0.0
    %666 = vmatpush1.msra.mxu0 %v634
    %667 = vmatprep.subr.mxu0 0.0
    %668 = vmatpush1.msra.mxu0 0.0
    %669 = vmatprep.subr.mxu0 0.0
    %670 = vmatpush1.msra.mxu0 0.0
    %671 = vmatprep.subr.mxu0 0.0
    %672 = vmatpush1.msra.mxu0 0.0
    %673 = vmatprep.subr.mxu0 0.0
    %674 = vmatpush1.msra.mxu0 0.0
    %675 = vmatprep.subr.mxu0 0.0
    %676 = vmatpush1.msra.mxu0 0.0
    %677 = vmatprep.subr.mxu0 0.0
    %678 = vmatpush1.msra.mxu0 0.0
    %679 = vmatprep.subr.mxu0 0.0
    %680 = vmatpush1.msra.mxu0 0.0
    %681 = vmatprep.subr.mxu0 0.0
    %682 = vmatpush1.msra.mxu0 0.0
    %683 = vmatprep.subr.mxu0 0.0
    %684 = vmatpush1.msra.mxu0 0.0
    %685 = vmatprep.subr.mxu0 0.0
    %686 = vmatpush1.msra.mxu0 0.0
    %687 = vmatprep.subr.mxu0 0.0
    %688 = vmatpush1.msra.mxu0 0.0
    %689 = vmatprep.subr.mxu0 0.0
    %690 = vmatpush1.msra.mxu0 0.0
    %691 = vmatprep.subr.mxu0 0.0
    %692 = vmatpush1.msra.mxu0 0.0
    %693 = vmatprep.subr.mxu0 0.0
    %694 = vmatpush1.msra.mxu0 0.0
    %695 = vmatprep.subr.mxu0 0.0
    %696 = vmatpush1.msra.mxu0 0.0
    %697 = vmatprep.subr.mxu0 0.0
    %698 = vmatpush1.msra.mxu0 0.0
    %699 = vmatprep.mubr.f32.mxu0 0.0
    %700 = vmatmul.mubr.f32.gmra.mrb[0].mxu0 %v611
    %v701 = vpop.f32.mrb[0].mxu0
    %v702 = vadd.f32 0.0, %v701
    %v703 = vpop.f32.mrb[0].mxu0
    %704 = vmatprep.mubr.f32.mxu0 0.0
    %705 = vmatmul.mubr.f32.gmra.mrb[0].mxu0 %v612
    %v706 = vpop.f32.mrb[0].mxu0
    %v707 = vadd.f32 0.0, %v706
    %v708 = vpop.f32.mrb[0].mxu0
    %709 = vmatprep.mubr.f32.mxu0 0.0
    %710 = vmatmul.mubr.f32.gmra.mrb[0].mxu0 %v613
    %v711 = vpop.f32.mrb[0].mxu0
    %v712 = vadd.f32 0.0, %v711
    %v713 = vpop.f32.mrb[0].mxu0
    %714 = vmatprep.mubr.f32.mxu0 0.0
    %715 = vmatmul.mubr.f32.gmra.mrb[0].mxu0 %v614
    %v716 = vpop.f32.mrb[0].mxu0
    %v717 = vadd.f32 0.0, %v716
    %v718 = vpop.f32.mrb[0].mxu0
    %719 = vmatprep.mubr.f32.mxu0 0.0
    %720 = vmatmul.mubr.f32.gmra.mrb[0].mxu0 %v615
    %v721 = vpop.f32.mrb[0].mxu0
    %v722 = vadd.f32 0.0, %v721
    %v723 = vpop.f32.mrb[0].mxu0
    %724 = vmatprep.mubr.f32.mxu0 0.0
    %725 = vmatmul.mubr.f32.gmra.mrb[0].mxu0 %v616
    %v726 = vpop.f32.mrb[0].mxu0
    %v727 = vadd.f32 0.0, %v726
    %v728 = vpop.f32.mrb[0].mxu0
    %729 = vmatprep.mubr.f32.mxu0 0.0
    %730 = vmatmul.mubr.f32.gmra.mrb[0].mxu0 %v617
    %v731 = vpop.f32.mrb[0].mxu0
    %v732 = vadd.f32 0.0, %v731
    %v733 = vpop.f32.mrb[0].mxu0
    %734 = vmatprep.mubr.f32.mxu0 0.0
    %735 = vmatmul.mubr.f32.gmra.mrb[0].mxu0 %v618
    %v736 = vpop.f32.mrb[0].mxu0
    %v737 = vadd.f32 0.0, %v736
    %v738 = vpop.f32.mrb[0].mxu0
    %739 = vdwg.mxu0
    %v740 = vld [vmem:[%s2] sm:$0xff]
    %v741 = vld [vmem:[%s2 + $0x8] sm:$0xff]
    %v742 = vld [vmem:[%s2 + $0x10] sm:$0xff]
    %v743 = vld [vmem:[%s2 + $0x18] sm:$0xff]
    %vm744 = vcmask 261120
    %v746 = vsel %vm744, 0.0, 0
    %748 = vmatprep.subr.mxu0 0.0
    %749 = vmatpush1.msra.mxu0 %v740
    %750 = vmatprep.subr.mxu0 0.0
    %751 = vmatpush1.msra.mxu0 %v741
    %752 = vmatprep.subr.mxu0 0.0
    %753 = vmatpush1.msra.mxu0 %v742
    %754 = vmatprep.subr.mxu0 0.0
    %755 = vmatpush1.msra.mxu0 %v743
    %756 = vmatprep.subr.mxu0 0.0
    %757 = vmatpush1.msra.mxu0 0.0
    %758 = vmatprep.subr.mxu0 0.0
    %759 = vmatpush1.msra.mxu0 0.0
    %760 = vmatprep.subr.mxu0 0.0
    %761 = vmatpush1.msra.mxu0 0.0
    %762 = vmatprep.subr.mxu0 0.0
    %763 = vmatpush1.msra.mxu0 0.0
    %764 = vmatprep.subr.mxu0 0.0
    %765 = vmatpush1.msra.mxu0 0.0
    %766 = vmatprep.subr.mxu0 0.0
    %767 = vmatpush1.msra.mxu0 0.0
    %768 = vmatprep.subr.mxu0 0.0
    %769 = vmatpush1.msra.mxu0 0.0
    %770 = vmatprep.subr.mxu0 0.0
    %771 = vmatpush1.msra.mxu0 0.0
    %772 = vmatprep.subr.mxu0 0.0
    %773 = vmatpush1.msra.mxu0 0.0
    %774 = vmatprep.subr.mxu0 0.0
    %775 = vmatpush1.msra.mxu0 0.0
    %776 = vmatprep.subr.mxu0 0.0
    %777 = vmatpush1.msra.mxu0 0.0
    %778 = vmatprep.subr.mxu0 0.0
    %779 = vmatpush1.msra.mxu0 0.0
    %780 = vmatprep.subr.mxu0 0.0
    %781 = vmatpush1.msra.mxu0 0.0
    %782 = vmatprep.subr.mxu0 0.0
    %783 = vmatpush1.msra.mxu0 0.0
    %784 = vmatprep.subr.mxu0 0.0
    %785 = vmatpush1.msra.mxu0 0.0
    %786 = vmatprep.subr.mxu0 0.0
    %787 = vmatpush1.msra.mxu0 0.0
    %788 = vmatprep.subr.mxu0 0.0
    %789 = vmatpush1.msra.mxu0 0.0
    %790 = vmatprep.subr.mxu0 0.0
    %791 = vmatpush1.msra.mxu0 0.0
    %792 = vmatprep.subr.mxu0 0.0
    %793 = vmatpush1.msra.mxu0 0.0
    %794 = vmatprep.subr.mxu0 0.0
    %795 = vmatpush1.msra.mxu0 0.0
    %796 = vmatprep.subr.mxu0 0.0
    %797 = vmatpush1.msra.mxu0 0.0
    %798 = vmatprep.subr.mxu0 0.0
    %799 = vmatpush1.msra.mxu0 0.0
    %800 = vmatprep.subr.mxu0 0.0
    %801 = vmatpush1.msra.mxu0 0.0
    %802 = vmatprep.subr.mxu0 0.0
    %803 = vmatpush1.msra.mxu0 0.0
    %804 = vmatprep.subr.mxu0 0.0
    %805 = vmatpush1.msra.mxu0 0.0
    %806 = vmatprep.subr.mxu0 0.0
    %807 = vmatpush1.msra.mxu0 0.0
    %808 = vmatprep.subr.mxu0 0.0
    %809 = vmatpush1.msra.mxu0 0.0
    %810 = vmatprep.subr.mxu0 0.0
    %811 = vmatpush1.msra.mxu0 0.0
    %812 = vmatprep.mubr.f32.mxu0 0.0
    %813 = vmatmul.mubr.f32.gmra.mrb[0].mxu0 %v746
    %v814 = vpop.f32.mrb[0].mxu0
    %v815 = vadd.f32 0.0, %v814
    %v816 = vpop.f32.mrb[0].mxu0
    %817 = vdwg.mxu0
    %v818 = vadd.f32 %v702, %v815
    %v819 = vmul.f32 %v818, 0.5
    %v820 = vtanh.pop %v819
    %v821 = vadd.f32 %v820, 1.0
    %v822 = vmul.f32 %v821, 0.5
    %v823 = vtanh.pop %v818
    %v824 = vmul.f32 %v822, 0.0
    %826 = vrot.lane.b32.xlu0 %v823, 64
    %v827 = vpop.permute.xlu0 %826
    %v829 = vmul.f32 %v822, %v827
    %831 = vrot.lane.b32.xlu0 %v829, 32
    %v832 = vpop.permute.xlu0 %831
    %v834 = vadd.f32 %v824, %v832
    %v835 = vtanh.pop %v834
    %837 = vrot.lane.b32.xlu0 %v835, 64
    %v838 = vpop.permute.xlu0 %837
    %v840 = vmul.f32 %v822, %v838
    %842 = vrot.lane.b32.xlu0 %v840, 32
    %v843 = vpop.permute.xlu0 %842
    %v844 = vsel %vm744, %v843, 0
    %846 = vmatprep.subr.mxu0 0.0
    %847 = vmatpush1.msra.mxu0 %v740
    %848 = vmatprep.subr.mxu0 0.0
    %849 = vmatpush1.msra.mxu0 %v741
    %850 = vmatprep.subr.mxu0 0.0
    %851 = vmatpush1.msra.mxu0 %v742
    %852 = vmatprep.subr.mxu0 0.0
    %853 = vmatpush1.msra.mxu0 %v743
    %854 = vmatprep.subr.mxu0 0.0
    %855 = vmatpush1.msra.mxu0 0.0
    %856 = vmatprep.subr.mxu0 0.0
    %857 = vmatpush1.msra.mxu0 0.0
    %858 = vmatprep.subr.mxu0 0.0
    %859 = vmatpush1.msra.mxu0 0.0
    %860 = vmatprep.subr.mxu0 0.0
    %861 = vmatpush1.msra.mxu0 0.0
    %862 = vmatprep.subr.mxu0 0.0
    %863 = vmatpush1.msra.mxu0 0.0
    %864 = vmatprep.subr.mxu0 0.0
    %865 = vmatpush1.msra.mxu0 0.0
    %866 = vmatprep.subr.mxu0 0.0
    %867 = vmatpush1.msra.mxu0 0.0
    %868 = vmatprep.subr.mxu0 0.0
    %869 = vmatpush1.msra.mxu0 0.0
    %870 = vmatprep.subr.mxu0 0.0
    %871 = vmatpush1.msra.mxu0 0.0
    %872 = vmatprep.subr.mxu0 0.0
    %873 = vmatpush1.msra.mxu0 0.0
    %874 = vmatprep.subr.mxu0 0.0
    %875 = vmatpush1.msra.mxu0 0.0
    %876 = vmatprep.subr.mxu0 0.0
    %877 = vmatpush1.msra.mxu0 0.0
    %878 = vmatprep.subr.mxu0 0.0
    %879 = vmatpush1.msra.mxu0 0.0
    %880 = vmatprep.subr.mxu0 0.0
    %881 = vmatpush1.msra.mxu0 0.0
    %882 = vmatprep.subr.mxu0 0.0
    %883 = vmatpush1.msra.mxu0 0.0
    %884 = vmatprep.subr.mxu0 0.0
    %885 = vmatpush1.msra.mxu0 0.0
    %886 = vmatprep.subr.mxu0 0.0
    %887 = vmatpush1.msra.mxu0 0.0
    %888 = vmatprep.subr.mxu0 0.0
    %889 = vmatpush1.msra.mxu0 0.0
    %890 = vmatprep.subr.mxu0 0.0
    %891 = vmatpush1.msra.mxu0 0.0
    %892 = vmatprep.subr.mxu0 0.0
    %893 = vmatpush1.msra.mxu0 0.0
    %894 = vmatprep.subr.mxu0 0.0
    %895 = vmatpush1.msra.mxu0 0.0
    %896 = vmatprep.subr.mxu0 0.0
    %897 = vmatpush1.msra.mxu0 0.0
    %898 = vmatprep.subr.mxu0 0.0
    %899 = vmatpush1.msra.mxu0 0.0
    %900 = vmatprep.subr.mxu0 0.0
    %901 = vmatpush1.msra.mxu0 0.0
    %902 = vmatprep.subr.mxu0 0.0
    %903 = vmatpush1.msra.mxu0 0.0
    %904 = vmatprep.subr.mxu0 0.0
    %905 = vmatpush1.msra.mxu0 0.0
    %906 = vmatprep.subr.mxu0 0.0
    %907 = vmatpush1.msra.mxu0 0.0
    %908 = vmatprep.subr.mxu0 0.0
    %909 = vmatpush1.msra.mxu0 0.0
    %910 = vmatprep.mubr.f32.mxu0 0.0
    %911 = vmatmul.mubr.f32.gmra.mrb[0].mxu0 %v844
    %v912 = vpop.f32.mrb[0].mxu0
    %v913 = vadd.f32 0.0, %v912
    %v914 = vpop.f32.mrb[0].mxu0
    %915 = vdwg.mxu0
    %v916 = vadd.f32 %v707, %v913
    %v917 = vmul.f32 %v916, 0.5
    %v918 = vtanh.pop %v917
    %v919 = vadd.f32 %v918, 1.0
    %v920 = vmul.f32 %v919, 0.5
    %v921 = vtanh.pop %v916
    %v922 = vmul.f32 %v920, %v834
    %924 = vrot.lane.b32.xlu0 %v921, 64
    %v925 = vpop.permute.xlu0 %924
    %v927 = vmul.f32 %v920, %v925
    %929 = vrot.lane.b32.xlu0 %v927, 32
    %v930 = vpop.permute.xlu0 %929
    %v932 = vadd.f32 %v922, %v930
    %v933 = vtanh.pop %v932
    %935 = vrot.lane.b32.xlu0 %v933, 64
    %v936 = vpop.permute.xlu0 %935
    %v938 = vmul.f32 %v920, %v936
    %940 = vrot.lane.b32.xlu0 %v938, 32
    %v941 = vpop.permute.xlu0 %940
    %v942 = vsel %vm744, %v941, 0
    %944 = vmatprep.subr.mxu0 0.0
    %945 = vmatpush1.msra.mxu0 %v740
    %946 = vmatprep.subr.mxu0 0.0
    %947 = vmatpush1.msra.mxu0 %v741
    %948 = vmatprep.subr.mxu0 0.0
    %949 = vmatpush1.msra.mxu0 %v742
    %950 = vmatprep.subr.mxu0 0.0
    %951 = vmatpush1.msra.mxu0 %v743
    %952 = vmatprep.subr.mxu0 0.0
    %953 = vmatpush1.msra.mxu0 0.0
    %954 = vmatprep.subr.mxu0 0.0
    %955 = vmatpush1.msra.mxu0 0.0
    %956 = vmatprep.subr.mxu0 0.0
    %957 = vmatpush1.msra.mxu0 0.0
    %958 = vmatprep.subr.mxu0 0.0
    %959 = vmatpush1.msra.mxu0 0.0
    %960 = vmatprep.subr.mxu0 0.0
    %961 = vmatpush1.msra.mxu0 0.0
    %962 = vmatprep.subr.mxu0 0.0
    %963 = vmatpush1.msra.mxu0 0.0
    %964 = vmatprep.subr.mxu0 0.0
    %965 = vmatpush1.msra.mxu0 0.0
    %966 = vmatprep.subr.mxu0 0.0
    %967 = vmatpush1.msra.mxu0 0.0
    %968 = vmatprep.subr.mxu0 0.0
    %969 = vmatpush1.msra.mxu0 0.0
    %970 = vmatprep.subr.mxu0 0.0
    %971 = vmatpush1.msra.mxu0 0.0
    %972 = vmatprep.subr.mxu0 0.0
    %973 = vmatpush1.msra.mxu0 0.0
    %974 = vmatprep.subr.mxu0 0.0
    %975 = vmatpush1.msra.mxu0 0.0
    %976 = vmatprep.subr.mxu0 0.0
    %977 = vmatpush1.msra.mxu0 0.0
    %978 = vmatprep.subr.mxu0 0.0
    %979 = vmatpush1.msra.mxu0 0.0
    %980 = vmatprep.subr.mxu0 0.0
    %981 = vmatpush1.msra.mxu0 0.0
    %982 = vmatprep.subr.mxu0 0.0
    %983 = vmatpush1.msra.mxu0 0.0
    %984 = vmatprep.subr.mxu0 0.0
    %985 = vmatpush1.msra.mxu0 0.0
    %986 = vmatprep.subr.mxu0 0.0
    %987 = vmatpush1.msra.mxu0 0.0
    %988 = vmatprep.subr.mxu0 0.0
    %989 = vmatpush1.msra.mxu0 0.0
    %990 = vmatprep.subr.mxu0 0.0
    %991 = vmatpush1.msra.mxu0 0.0
    %992 = vmatprep.subr.mxu0 0.0
    %993 = vmatpush1.msra.mxu0 0.0
    %994 = vmatprep.subr.mxu0 0.0
    %995 = vmatpush1.msra.mxu0 0.0
    %996 = vmatprep.subr.mxu0 0.0
    %997 = vmatpush1.msra.mxu0 0.0
    %998 = vmatprep.subr.mxu0 0.0
    %999 = vmatpush1.msra.mxu0 0.0
    %1000 = vmatprep.subr.mxu0 0.0
    %1001 = vmatpush1.msra.mxu0 0.0
    %1002 = vmatprep.subr.mxu0 0.0
    %1003 = vmatpush1.msra.mxu0 0.0
    %1004 = vmatprep.subr.mxu0 0.0
    %1005 = vmatpush1.msra.mxu0 0.0
    %1006 = vmatprep.subr.mxu0 0.0
    %1007 = vmatpush1.msra.mxu0 0.0
    %1008 = vmatprep.mubr.f32.mxu0 0.0
    %1009 = vmatmul.mubr.f32.gmra.mrb[0].mxu0 %v942
    %v1010 = vpop.f32.mrb[0].mxu0
    %v1011 = vadd.f32 0.0, %v1010
    %v1012 = vpop.f32.mrb[0].mxu0
    %1013 = vdwg.mxu0
    %v1014 = vadd.f32 %v712, %v1011
    %v1015 = vmul.f32 %v1014, 0.5
    %v1016 = vtanh.pop %v1015
    %v1017 = vadd.f32 %v1016, 1.0
    %v1018 = vmul.f32 %v1017, 0.5
    %v1019 = vtanh.pop %v1014
    %v1020 = vmul.f32 %v1018, %v932
    %1022 = vrot.lane.b32.xlu0 %v1019, 64
    %v1023 = vpop.permute.xlu0 %1022
    %v1025 = vmul.f32 %v1018, %v1023
    %1027 = vrot.lane.b32.xlu0 %v1025, 32
    %v1028 = vpop.permute.xlu0 %1027
    %v1030 = vadd.f32 %v1020, %v1028
    %v1031 = vtanh.pop %v1030
    %1033 = vrot.lane.b32.xlu0 %v1031, 64
    %v1034 = vpop.permute.xlu0 %1033
    %v1036 = vmul.f32 %v1018, %v1034
    %1038 = vrot.lane.b32.xlu0 %v1036, 32
    %v1039 = vpop.permute.xlu0 %1038
    %v1040 = vsel %vm744, %v1039, 0
    %1042 = vmatprep.subr.mxu0 0.0
    %1043 = vmatpush1.msra.mxu0 %v740
    %1044 = vmatprep.subr.mxu0 0.0
    %1045 = vmatpush1.msra.mxu0 %v741
    %1046 = vmatprep.subr.mxu0 0.0
    %1047 = vmatpush1.msra.mxu0 %v742
    %1048 = vmatprep.subr.mxu0 0.0
    %1049 = vmatpush1.msra.mxu0 %v743
    %1050 = vmatprep.subr.mxu0 0.0
    %1051 = vmatpush1.msra.mxu0 0.0
    %1052 = vmatprep.subr.mxu0 0.0
    %1053 = vmatpush1.msra.mxu0 0.0
    %1054 = vmatprep.subr.mxu0 0.0
    %1055 = vmatpush1.msra.mxu0 0.0
    %1056 = vmatprep.subr.mxu0 0.0
    %1057 = vmatpush1.msra.mxu0 0.0
    %1058 = vmatprep.subr.mxu0 0.0
    %1059 = vmatpush1.msra.mxu0 0.0
    %1060 = vmatprep.subr.mxu0 0.0
    %1061 = vmatpush1.msra.mxu0 0.0
    %1062 = vmatprep.subr.mxu0 0.0
    %1063 = vmatpush1.msra.mxu0 0.0
    %1064 = vmatprep.subr.mxu0 0.0
    %1065 = vmatpush1.msra.mxu0 0.0
    %1066 = vmatprep.subr.mxu0 0.0
    %1067 = vmatpush1.msra.mxu0 0.0
    %1068 = vmatprep.subr.mxu0 0.0
    %1069 = vmatpush1.msra.mxu0 0.0
    %1070 = vmatprep.subr.mxu0 0.0
    %1071 = vmatpush1.msra.mxu0 0.0
    %1072 = vmatprep.subr.mxu0 0.0
    %1073 = vmatpush1.msra.mxu0 0.0
    %1074 = vmatprep.subr.mxu0 0.0
    %1075 = vmatpush1.msra.mxu0 0.0
    %1076 = vmatprep.subr.mxu0 0.0
    %1077 = vmatpush1.msra.mxu0 0.0
    %1078 = vmatprep.subr.mxu0 0.0
    %1079 = vmatpush1.msra.mxu0 0.0
    %1080 = vmatprep.subr.mxu0 0.0
    %1081 = vmatpush1.msra.mxu0 0.0
    %1082 = vmatprep.subr.mxu0 0.0
    %1083 = vmatpush1.msra.mxu0 0.0
    %1084 = vmatprep.subr.mxu0 0.0
    %1085 = vmatpush1.msra.mxu0 0.0
    %1086 = vmatprep.subr.mxu0 0.0
    %1087 = vmatpush1.msra.mxu0 0.0
    %1088 = vmatprep.subr.mxu0 0.0
    %1089 = vmatpush1.msra.mxu0 0.0
    %1090 = vmatprep.subr.mxu0 0.0
    %1091 = vmatpush1.msra.mxu0 0.0
    %1092 = vmatprep.subr.mxu0 0.0
    %1093 = vmatpush1.msra.mxu0 0.0
    %1094 = vmatprep.subr.mxu0 0.0
    %1095 = vmatpush1.msra.mxu0 0.0
    %1096 = vmatprep.subr.mxu0 0.0
    %1097 = vmatpush1.msra.mxu0 0.0
    %1098 = vmatprep.subr.mxu0 0.0
    %1099 = vmatpush1.msra.mxu0 0.0
    %1100 = vmatprep.subr.mxu0 0.0
    %1101 = vmatpush1.msra.mxu0 0.0
    %1102 = vmatprep.subr.mxu0 0.0
    %1103 = vmatpush1.msra.mxu0 0.0
    %1104 = vmatprep.subr.mxu0 0.0
    %1105 = vmatpush1.msra.mxu0 0.0
    %1106 = vmatprep.mubr.f32.mxu0 0.0
    %1107 = vmatmul.mubr.f32.gmra.mrb[0].mxu0 %v1040
    %v1108 = vpop.f32.mrb[0].mxu0
    %v1109 = vadd.f32 0.0, %v1108
    %v1110 = vpop.f32.mrb[0].mxu0
    %1111 = vdwg.mxu0
    %v1112 = vadd.f32 %v717, %v1109
    %v1113 = vmul.f32 %v1112, 0.5
    %v1114 = vtanh.pop %v1113
    %v1115 = vadd.f32 %v1114, 1.0
    %v1116 = vmul.f32 %v1115, 0.5
    %v1117 = vtanh.pop %v1112
    %v1118 = vmul.f32 %v1116, %v1030
    %1120 = vrot.lane.b32.xlu0 %v1117, 64
    %v1121 = vpop.permute.xlu0 %1120
    %v1123 = vmul.f32 %v1116, %v1121
    %1125 = vrot.lane.b32.xlu0 %v1123, 32
    %v1126 = vpop.permute.xlu0 %1125
    %v1128 = vadd.f32 %v1118, %v1126
    %v1129 = vtanh.pop %v1128
    %1131 = vrot.lane.b32.xlu0 %v1129, 64
    %v1132 = vpop.permute.xlu0 %1131
    %v1134 = vmul.f32 %v1116, %v1132
    %1136 = vrot.lane.b32.xlu0 %v1134, 32
    %v1137 = vpop.permute.xlu0 %1136
    %v1138 = vsel %vm744, %v1137, 0
    %1140 = vmatprep.subr.mxu0 0.0
    %1141 = vmatpush1.msra.mxu0 %v740
    %1142 = vmatprep.subr.mxu0 0.0
    %1143 = vmatpush1.msra.mxu0 %v741
    %1144 = vmatprep.subr.mxu0 0.0
    %1145 = vmatpush1.msra.mxu0 %v742
    %1146 = vmatprep.subr.mxu0 0.0
    %1147 = vmatpush1.msra.mxu0 %v743
    %1148 = vmatprep.subr.mxu0 0.0
    %1149 = vmatpush1.msra.mxu0 0.0
    %1150 = vmatprep.subr.mxu0 0.0
    %1151 = vmatpush1.msra.mxu0 0.0
    %1152 = vmatprep.subr.mxu0 0.0
    %1153 = vmatpush1.msra.mxu0 0.0
    %1154 = vmatprep.subr.mxu0 0.0
    %1155 = vmatpush1.msra.mxu0 0.0
    %1156 = vmatprep.subr.mxu0 0.0
    %1157 = vmatpush1.msra.mxu0 0.0
    %1158 = vmatprep.subr.mxu0 0.0
    %1159 = vmatpush1.msra.mxu0 0.0
    %1160 = vmatprep.subr.mxu0 0.0
    %1161 = vmatpush1.msra.mxu0 0.0
    %1162 = vmatprep.subr.mxu0 0.0
    %1163 = vmatpush1.msra.mxu0 0.0
    %1164 = vmatprep.subr.mxu0 0.0
    %1165 = vmatpush1.msra.mxu0 0.0
    %1166 = vmatprep.subr.mxu0 0.0
    %1167 = vmatpush1.msra.mxu0 0.0
    %1168 = vmatprep.subr.mxu0 0.0
    %1169 = vmatpush1.msra.mxu0 0.0
    %1170 = vmatprep.subr.mxu0 0.0
    %1171 = vmatpush1.msra.mxu0 0.0
    %1172 = vmatprep.subr.mxu0 0.0
    %1173 = vmatpush1.msra.mxu0 0.0
    %1174 = vmatprep.subr.mxu0 0.0
    %1175 = vmatpush1.msra.mxu0 0.0
    %1176 = vmatprep.subr.mxu0 0.0
    %1177 = vmatpush1.msra.mxu0 0.0
    %1178 = vmatprep.subr.mxu0 0.0
    %1179 = vmatpush1.msra.mxu0 0.0
    %1180 = vmatprep.subr.mxu0 0.0
    %1181 = vmatpush1.msra.mxu0 0.0
    %1182 = vmatprep.subr.mxu0 0.0
    %1183 = vmatpush1.msra.mxu0 0.0
    %1184 = vmatprep.subr.mxu0 0.0
    %1185 = vmatpush1.msra.mxu0 0.0
    %1186 = vmatprep.subr.mxu0 0.0
    %1187 = vmatpush1.msra.mxu0 0.0
    %1188 = vmatprep.subr.mxu0 0.0
    %1189 = vmatpush1.msra.mxu0 0.0
    %1190 = vmatprep.subr.mxu0 0.0
    %1191 = vmatpush1.msra.mxu0 0.0
    %1192 = vmatprep.subr.mxu0 0.0
    %1193 = vmatpush1.msra.mxu0 0.0
    %1194 = vmatprep.subr.mxu0 0.0
    %1195 = vmatpush1.msra.mxu0 0.0
    %1196 = vmatprep.subr.mxu0 0.0
    %1197 = vmatpush1.msra.mxu0 0.0
    %1198 = vmatprep.subr.mxu0 0.0
    %1199 = vmatpush1.msra.mxu0 0.0
    %1200 = vmatprep.subr.mxu0 0.0
    %1201 = vmatpush1.msra.mxu0 0.0
    %1202 = vmatprep.subr.mxu0 0.0
    %1203 = vmatpush1.msra.mxu0 0.0
    %1204 = vmatprep.mubr.f32.mxu0 0.0
    %1205 = vmatmul.mubr.f32.gmra.mrb[0].mxu0 %v1138
    %v1206 = vpop.f32.mrb[0].mxu0
    %v1207 = vadd.f32 0.0, %v1206
    %v1208 = vpop.f32.mrb[0].mxu0
    %1209 = vdwg.mxu0
    %v1210 = vadd.f32 %v722, %v1207
    %v1211 = vmul.f32 %v1210, 0.5
    %v1212 = vtanh.pop %v1211
    %v1213 = vadd.f32 %v1212, 1.0
    %v1214 = vmul.f32 %v1213, 0.5
    %v1215 = vtanh.pop %v1210
    %v1216 = vmul.f32 %v1214, %v1128
    %1218 = vrot.lane.b32.xlu0 %v1215, 64
    %v1219 = vpop.permute.xlu0 %1218
    %v1221 = vmul.f32 %v1214, %v1219
    %1223 = vrot.lane.b32.xlu0 %v1221, 32
    %v1224 = vpop.permute.xlu0 %1223
    %v1226 = vadd.f32 %v1216, %v1224
    %v1227 = vtanh.pop %v1226
    %1229 = vrot.lane.b32.xlu0 %v1227, 64
    %v1230 = vpop.permute.xlu0 %1229
    %v1232 = vmul.f32 %v1214, %v1230
    %1234 = vrot.lane.b32.xlu0 %v1232, 32
    %v1235 = vpop.permute.xlu0 %1234
    %v1236 = vsel %vm744, %v1235, 0
    %1238 = vmatprep.subr.mxu0 0.0
    %1239 = vmatpush1.msra.mxu0 %v740
    %1240 = vmatprep.subr.mxu0 0.0
    %1241 = vmatpush1.msra.mxu0 %v741
    %1242 = vmatprep.subr.mxu0 0.0
    %1243 = vmatpush1.msra.mxu0 %v742
    %1244 = vmatprep.subr.mxu0 0.0
    %1245 = vmatpush1.msra.mxu0 %v743
    %1246 = vmatprep.subr.mxu0 0.0
    %1247 = vmatpush1.msra.mxu0 0.0
    %1248 = vmatprep.subr.mxu0 0.0
    %1249 = vmatpush1.msra.mxu0 0.0
    %1250 = vmatprep.subr.mxu0 0.0
    %1251 = vmatpush1.msra.mxu0 0.0
    %1252 = vmatprep.subr.mxu0 0.0
    %1253 = vmatpush1.msra.mxu0 0.0
    %1254 = vmatprep.subr.mxu0 0.0
    %1255 = vmatpush1.msra.mxu0 0.0
    %1256 = vmatprep.subr.mxu0 0.0
    %1257 = vmatpush1.msra.mxu0 0.0
    %1258 = vmatprep.subr.mxu0 0.0
    %1259 = vmatpush1.msra.mxu0 0.0
    %1260 = vmatprep.subr.mxu0 0.0
    %1261 = vmatpush1.msra.mxu0 0.0
    %1262 = vmatprep.subr.mxu0 0.0
    %1263 = vmatpush1.msra.mxu0 0.0
    %1264 = vmatprep.subr.mxu0 0.0
    %1265 = vmatpush1.msra.mxu0 0.0
    %1266 = vmatprep.subr.mxu0 0.0
    %1267 = vmatpush1.msra.mxu0 0.0
    %1268 = vmatprep.subr.mxu0 0.0
    %1269 = vmatpush1.msra.mxu0 0.0
    %1270 = vmatprep.subr.mxu0 0.0
    %1271 = vmatpush1.msra.mxu0 0.0
    %1272 = vmatprep.subr.mxu0 0.0
    %1273 = vmatpush1.msra.mxu0 0.0
    %1274 = vmatprep.subr.mxu0 0.0
    %1275 = vmatpush1.msra.mxu0 0.0
    %1276 = vmatprep.subr.mxu0 0.0
    %1277 = vmatpush1.msra.mxu0 0.0
    %1278 = vmatprep.subr.mxu0 0.0
    %1279 = vmatpush1.msra.mxu0 0.0
    %1280 = vmatprep.subr.mxu0 0.0
    %1281 = vmatpush1.msra.mxu0 0.0
    %1282 = vmatprep.subr.mxu0 0.0
    %1283 = vmatpush1.msra.mxu0 0.0
    %1284 = vmatprep.subr.mxu0 0.0
    %1285 = vmatpush1.msra.mxu0 0.0
    %1286 = vmatprep.subr.mxu0 0.0
    %1287 = vmatpush1.msra.mxu0 0.0
    %1288 = vmatprep.subr.mxu0 0.0
    %1289 = vmatpush1.msra.mxu0 0.0
    %1290 = vmatprep.subr.mxu0 0.0
    %1291 = vmatpush1.msra.mxu0 0.0
    %1292 = vmatprep.subr.mxu0 0.0
    %1293 = vmatpush1.msra.mxu0 0.0
    %1294 = vmatprep.subr.mxu0 0.0
    %1295 = vmatpush1.msra.mxu0 0.0
    %1296 = vmatprep.subr.mxu0 0.0
    %1297 = vmatpush1.msra.mxu0 0.0
    %1298 = vmatprep.subr.mxu0 0.0
    %1299 = vmatpush1.msra.mxu0 0.0
    %1300 = vmatprep.subr.mxu0 0.0
    %1301 = vmatpush1.msra.mxu0 0.0
    %1302 = vmatprep.mubr.f32.mxu0 0.0
    %1303 = vmatmul.mubr.f32.gmra.mrb[0].mxu0 %v1236
    %v1304 = vpop.f32.mrb[0].mxu0
    %v1305 = vadd.f32 0.0, %v1304
    %v1306 = vpop.f32.mrb[0].mxu0
    %1307 = vdwg.mxu0
    %v1308 = vadd.f32 %v727, %v1305
    %v1309 = vmul.f32 %v1308, 0.5
    %v1310 = vtanh.pop %v1309
    %v1311 = vadd.f32 %v1310, 1.0
    %v1312 = vmul.f32 %v1311, 0.5
    %v1313 = vtanh.pop %v1308
    %v1314 = vmul.f32 %v1312, %v1226
    %1316 = vrot.lane.b32.xlu0 %v1313, 64
    %v1317 = vpop.permute.xlu0 %1316
    %v1319 = vmul.f32 %v1312, %v1317
    %1321 = vrot.lane.b32.xlu0 %v1319, 32
    %v1322 = vpop.permute.xlu0 %1321
    %v1324 = vadd.f32 %v1314, %v1322
    %v1325 = vtanh.pop %v1324
    %1327 = vrot.lane.b32.xlu0 %v1325, 64
    %v1328 = vpop.permute.xlu0 %1327
    %v1330 = vmul.f32 %v1312, %v1328
    %1332 = vrot.lane.b32.xlu0 %v1330, 32
    %v1333 = vpop.permute.xlu0 %1332
    %v1334 = vsel %vm744, %v1333, 0
    %1336 = vmatprep.subr.mxu0 0.0
    %1337 = vmatpush1.msra.mxu0 %v740
    %1338 = vmatprep.subr.mxu0 0.0
    %1339 = vmatpush1.msra.mxu0 %v741
    %1340 = vmatprep.subr.mxu0 0.0
    %1341 = vmatpush1.msra.mxu0 %v742
    %1342 = vmatprep.subr.mxu0 0.0
    %1343 = vmatpush1.msra.mxu0 %v743
    %1344 = vmatprep.subr.mxu0 0.0
    %1345 = vmatpush1.msra.mxu0 0.0
    %1346 = vmatprep.subr.mxu0 0.0
    %1347 = vmatpush1.msra.mxu0 0.0
    %1348 = vmatprep.subr.mxu0 0.0
    %1349 = vmatpush1.msra.mxu0 0.0
    %1350 = vmatprep.subr.mxu0 0.0
    %1351 = vmatpush1.msra.mxu0 0.0
    %1352 = vmatprep.subr.mxu0 0.0
    %1353 = vmatpush1.msra.mxu0 0.0
    %1354 = vmatprep.subr.mxu0 0.0
    %1355 = vmatpush1.msra.mxu0 0.0
    %1356 = vmatprep.subr.mxu0 0.0
    %1357 = vmatpush1.msra.mxu0 0.0
    %1358 = vmatprep.subr.mxu0 0.0
    %1359 = vmatpush1.msra.mxu0 0.0
    %1360 = vmatprep.subr.mxu0 0.0
    %1361 = vmatpush1.msra.mxu0 0.0
    %1362 = vmatprep.subr.mxu0 0.0
    %1363 = vmatpush1.msra.mxu0 0.0
    %1364 = vmatprep.subr.mxu0 0.0
    %1365 = vmatpush1.msra.mxu0 0.0
    %1366 = vmatprep.subr.mxu0 0.0
    %1367 = vmatpush1.msra.mxu0 0.0
    %1368 = vmatprep.subr.mxu0 0.0
    %1369 = vmatpush1.msra.mxu0 0.0
    %1370 = vmatprep.subr.mxu0 0.0
    %1371 = vmatpush1.msra.mxu0 0.0
    %1372 = vmatprep.subr.mxu0 0.0
    %1373 = vmatpush1.msra.mxu0 0.0
    %1374 = vmatprep.subr.mxu0 0.0
    %1375 = vmatpush1.msra.mxu0 0.0
    %1376 = vmatprep.subr.mxu0 0.0
    %1377 = vmatpush1.msra.mxu0 0.0
    %1378 = vmatprep.subr.mxu0 0.0
    %1379 = vmatpush1.msra.mxu0 0.0
    %1380 = vmatprep.subr.mxu0 0.0
    %1381 = vmatpush1.msra.mxu0 0.0
    %1382 = vmatprep.subr.mxu0 0.0
    %1383 = vmatpush1.msra.mxu0 0.0
    %1384 = vmatprep.subr.mxu0 0.0
    %1385 = vmatpush1.msra.mxu0 0.0
    %1386 = vmatprep.subr.mxu0 0.0
    %1387 = vmatpush1.msra.mxu0 0.0
    %1388 = vmatprep.subr.mxu0 0.0
    %1389 = vmatpush1.msra.mxu0 0.0
    %1390 = vmatprep.subr.mxu0 0.0
    %1391 = vmatpush1.msra.mxu0 0.0
    %1392 = vmatprep.subr.mxu0 0.0
    %1393 = vmatpush1.msra.mxu0 0.0
    %1394 = vmatprep.subr.mxu0 0.0
    %1395 = vmatpush1.msra.mxu0 0.0
    %1396 = vmatprep.subr.mxu0 0.0
    %1397 = vmatpush1.msra.mxu0 0.0
    %1398 = vmatprep.subr.mxu0 0.0
    %1399 = vmatpush1.msra.mxu0 0.0
    %1400 = vmatprep.mubr.f32.mxu0 0.0
    %1401 = vmatmul.mubr.f32.gmra.mrb[0].mxu0 %v1334
    %v1402 = vpop.f32.mrb[0].mxu0
    %v1403 = vadd.f32 0.0, %v1402
    %v1404 = vpop.f32.mrb[0].mxu0
    %1405 = vdwg.mxu0
    %v1406 = vadd.f32 %v732, %v1403
    %v1407 = vmul.f32 %v1406, 0.5
    %v1408 = vtanh.pop %v1407
    %v1409 = vadd.f32 %v1408, 1.0
    %v1410 = vmul.f32 %v1409, 0.5
    %v1411 = vtanh.pop %v1406
    %v1412 = vmul.f32 %v1410, %v1324
    %1414 = vrot.lane.b32.xlu0 %v1411, 64
    %v1415 = vpop.permute.xlu0 %1414
    %v1417 = vmul.f32 %v1410, %v1415
    %1419 = vrot.lane.b32.xlu0 %v1417, 32
    %v1420 = vpop.permute.xlu0 %1419
    %v1422 = vadd.f32 %v1412, %v1420
    %v1423 = vtanh.pop %v1422
    %1425 = vrot.lane.b32.xlu0 %v1423, 64
    %v1426 = vpop.permute.xlu0 %1425
    %v1428 = vmul.f32 %v1410, %v1426
    %1430 = vrot.lane.b32.xlu0 %v1428, 32
    %v1431 = vpop.permute.xlu0 %1430
    %v1432 = vsel %vm744, %v1431, 0
    %1434 = vmatprep.subr.mxu0 0.0
    %1435 = vmatpush1.msra.mxu0 %v740
    %1436 = vmatprep.subr.mxu0 0.0
    %1437 = vmatpush1.msra.mxu0 %v741
    %1438 = vmatprep.subr.mxu0 0.0
    %1439 = vmatpush1.msra.mxu0 %v742
    %1440 = vmatprep.subr.mxu0 0.0
    %1441 = vmatpush1.msra.mxu0 %v743
    %1442 = vmatprep.subr.mxu0 0.0
    %1443 = vmatpush1.msra.mxu0 0.0
    %1444 = vmatprep.subr.mxu0 0.0
    %1445 = vmatpush1.msra.mxu0 0.0
    %1446 = vmatprep.subr.mxu0 0.0
    %1447 = vmatpush1.msra.mxu0 0.0
    %1448 = vmatprep.subr.mxu0 0.0
    %1449 = vmatpush1.msra.mxu0 0.0
    %1450 = vmatprep.subr.mxu0 0.0
    %1451 = vmatpush1.msra.mxu0 0.0
    %1452 = vmatprep.subr.mxu0 0.0
    %1453 = vmatpush1.msra.mxu0 0.0
    %1454 = vmatprep.subr.mxu0 0.0
    %1455 = vmatpush1.msra.mxu0 0.0
    %1456 = vmatprep.subr.mxu0 0.0
    %1457 = vmatpush1.msra.mxu0 0.0
    %1458 = vmatprep.subr.mxu0 0.0
    %1459 = vmatpush1.msra.mxu0 0.0
    %1460 = vmatprep.subr.mxu0 0.0
    %1461 = vmatpush1.msra.mxu0 0.0
    %1462 = vmatprep.subr.mxu0 0.0
    %1463 = vmatpush1.msra.mxu0 0.0
    %1464 = vmatprep.subr.mxu0 0.0
    %1465 = vmatpush1.msra.mxu0 0.0
    %1466 = vmatprep.subr.mxu0 0.0
    %1467 = vmatpush1.msra.mxu0 0.0
    %1468 = vmatprep.subr.mxu0 0.0
    %1469 = vmatpush1.msra.mxu0 0.0
    %1470 = vmatprep.subr.mxu0 0.0
    %1471 = vmatpush1.msra.mxu0 0.0
    %1472 = vmatprep.subr.mxu0 0.0
    %1473 = vmatpush1.msra.mxu0 0.0
    %1474 = vmatprep.subr.mxu0 0.0
    %1475 = vmatpush1.msra.mxu0 0.0
    %1476 = vmatprep.subr.mxu0 0.0
    %1477 = vmatpush1.msra.mxu0 0.0
    %1478 = vmatprep.subr.mxu0 0.0
    %1479 = vmatpush1.msra.mxu0 0.0
    %1480 = vmatprep.subr.mxu0 0.0
    %1481 = vmatpush1.msra.mxu0 0.0
    %1482 = vmatprep.subr.mxu0 0.0
    %1483 = vmatpush1.msra.mxu0 0.0
    %1484 = vmatprep.subr.mxu0 0.0
    %1485 = vmatpush1.msra.mxu0 0.0
    %1486 = vmatprep.subr.mxu0 0.0
    %1487 = vmatpush1.msra.mxu0 0.0
    %1488 = vmatprep.subr.mxu0 0.0
    %1489 = vmatpush1.msra.mxu0 0.0
    %1490 = vmatprep.subr.mxu0 0.0
    %1491 = vmatpush1.msra.mxu0 0.0
    %1492 = vmatprep.subr.mxu0 0.0
    %1493 = vmatpush1.msra.mxu0 0.0
    %1494 = vmatprep.subr.mxu0 0.0
    %1495 = vmatpush1.msra.mxu0 0.0
    %1496 = vmatprep.subr.mxu0 0.0
    %1497 = vmatpush1.msra.mxu0 0.0
    %1498 = vmatprep.mubr.f32.mxu0 0.0
    %1499 = vmatmul.mubr.f32.gmra.mrb[0].mxu0 %v1432
    %v1500 = vpop.f32.mrb[0].mxu0
    %v1501 = vadd.f32 0.0, %v1500
    %v1502 = vpop.f32.mrb[0].mxu0
    %1503 = vdwg.mxu0
    %v1504 = vadd.f32 %v737, %v1501
    %v1505 = vmul.f32 %v1504, 0.5
    %v1506 = vtanh.pop %v1505
    %v1507 = vadd.f32 %v1506, 1.0
    %v1508 = vmul.f32 %v1507, 0.5
    %v1509 = vtanh.pop %v1504
    %v1510 = vmul.f32 %v1508, %v1422
    %1512 = vrot.lane.b32.xlu0 %v1509, 64
    %v1513 = vpop.permute.xlu0 %1512
    %v1515 = vmul.f32 %v1508, %v1513
    %1517 = vrot.lane.b32.xlu0 %v1515, 32
    %v1518 = vpop.permute.xlu0 %1517
    %v1520 = vadd.f32 %v1510, %v1518
    %v1521 = vtanh.pop %v1520
    %1523 = vrot.lane.b32.xlu0 %v1521, 64
    %v1524 = vpop.permute.xlu0 %1523
    %v1526 = vmul.f32 %v1508, %v1524
    %v1527 = vld [vmem:[%s3] sm:$0xff]
    %v1528 = vld [vmem:[%s3 + $0x8] sm:$0xff]
    %v1529 = vld [vmem:[%s3 + $0x10] sm:$0xff]
    %v1530 = vld [vmem:[%s3 + $0x18] sm:$0xff]
    %v1531 = vld [vmem:[%s4] sm:$0x1]
    %v1533 = vlaneseq
    %v1534 = vshrl.u32 %v1533, 7
    %v1535 = vsub.s32 0, %v1534
    %v1536 = vrot.slane %v1531, %v1535
    %1539 = vrot.lane.b32.xlu0 %v1526, 32
    %v1540 = vpop.permute.xlu0 %1539
    %v1541 = vsel %vm744, %v1540, 0
    %1543 = vmatprep.subr.mxu0 0.0
    %1544 = vmatpush1.msra.mxu0 %v1527
    %1545 = vmatprep.subr.mxu0 0.0
    %1546 = vmatpush1.msra.mxu0 %v1528
    %1547 = vmatprep.subr.mxu0 0.0
    %1548 = vmatpush1.msra.mxu0 %v1529
    %1549 = vmatprep.subr.mxu0 0.0
    %1550 = vmatpush1.msra.mxu0 %v1530
    %1551 = vmatprep.subr.mxu0 0.0
    %1552 = vmatpush1.msra.mxu0 0.0
    %1553 = vmatprep.subr.mxu0 0.0
    %1554 = vmatpush1.msra.mxu0 0.0
    %1555 = vmatprep.subr.mxu0 0.0
    %1556 = vmatpush1.msra.mxu0 0.0
    %1557 = vmatprep.subr.mxu0 0.0
    %1558 = vmatpush1.msra.mxu0 0.0
    %1559 = vmatprep.subr.mxu0 0.0
    %1560 = vmatpush1.msra.mxu0 0.0
    %1561 = vmatprep.subr.mxu0 0.0
    %1562 = vmatpush1.msra.mxu0 0.0
    %1563 = vmatprep.subr.mxu0 0.0
    %1564 = vmatpush1.msra.mxu0 0.0
    %1565 = vmatprep.subr.mxu0 0.0
    %1566 = vmatpush1.msra.mxu0 0.0
    %1567 = vmatprep.subr.mxu0 0.0
    %1568 = vmatpush1.msra.mxu0 0.0
    %1569 = vmatprep.subr.mxu0 0.0
    %1570 = vmatpush1.msra.mxu0 0.0
    %1571 = vmatprep.subr.mxu0 0.0
    %1572 = vmatpush1.msra.mxu0 0.0
    %1573 = vmatprep.subr.mxu0 0.0
    %1574 = vmatpush1.msra.mxu0 0.0
    %1575 = vmatprep.subr.mxu0 0.0
    %1576 = vmatpush1.msra.mxu0 0.0
    %1577 = vmatprep.subr.mxu0 0.0
    %1578 = vmatpush1.msra.mxu0 0.0
    %1579 = vmatprep.subr.mxu0 0.0
    %1580 = vmatpush1.msra.mxu0 0.0
    %1581 = vmatprep.subr.mxu0 0.0
    %1582 = vmatpush1.msra.mxu0 0.0
    %1583 = vmatprep.subr.mxu0 0.0
    %1584 = vmatpush1.msra.mxu0 0.0
    %1585 = vmatprep.subr.mxu0 0.0
    %1586 = vmatpush1.msra.mxu0 0.0
    %1587 = vmatprep.subr.mxu0 0.0
    %1588 = vmatpush1.msra.mxu0 0.0
    %1589 = vmatprep.subr.mxu0 0.0
    %1590 = vmatpush1.msra.mxu0 0.0
    %1591 = vmatprep.subr.mxu0 0.0
    %1592 = vmatpush1.msra.mxu0 0.0
    %1593 = vmatprep.subr.mxu0 0.0
    %1594 = vmatpush1.msra.mxu0 0.0
    %1595 = vmatprep.subr.mxu0 0.0
    %1596 = vmatpush1.msra.mxu0 0.0
    %1597 = vmatprep.subr.mxu0 0.0
    %1598 = vmatpush1.msra.mxu0 0.0
    %1599 = vmatprep.subr.mxu0 0.0
    %1600 = vmatpush1.msra.mxu0 0.0
    %1601 = vmatprep.subr.mxu0 0.0
    %1602 = vmatpush1.msra.mxu0 0.0
    %1603 = vmatprep.subr.mxu0 0.0
    %1604 = vmatpush1.msra.mxu0 0.0
    %1605 = vmatprep.subr.mxu0 0.0
    %1606 = vmatpush1.msra.mxu0 0.0
    %1607 = vmatprep.mubr.f32.mxu0 0.0
    %1608 = vmatmul.mubr.f32.gmra.mrb[0].mxu0 %v1541
    %v1609 = vpop.f32.mrb[0].mxu0
    %v1610 = vadd.f32 %v1536, %v1609
    %v1611 = vpop.f32.mrb[0].mxu0
    %1612 = vdwg.mxu0
    %vm1613 = vcmask 91136
    %1614 = vst.msk [vmem:[#allocation7] sm:$0x3] %vm1613, %v1610
    // Predicated region
    $region30: #{tpu_custom_call.1} parent=1 // pred_check
      _
    $region31: #{tpu_custom_call.1} parent=1 // pred_check_branch
      %1616 = sbr.rel (0) target = $region33
    $region32: #{tpu_custom_call.1} parent=1 // pred_region
      %s1618 = ssub.s32 32, 32
      %1619 = vsyncadd [#allocation4], %s1618
      %s1621 = sshll.u32 [#allocation7], 4
      %s1622 = int_to_ptr.vmem [resolvable:$true] %s1621
      %1624 = dma.vmem_to_hbm [thread:$0]  %s1622, 32, %s5, [#allocation4]
    $region33: #{tpu_custom_call.1} parent=1 // pred_fallthru
      _
    // Predicated region
    $region34: #{tpu_custom_call.1} parent=1 // pred_check
      _
    $region35: #{tpu_custom_call.1} parent=1 // pred_check_branch
      %1626 = sbr.rel (0) target = $region37
    $region36: #{tpu_custom_call.1} parent=1 // pred_region
      %1627 = dma.done [#allocation4], 32
    $region37: #{tpu_custom_call.1} parent=1 // pred_fallthru
      _
    %1628 = vsyncpa [#allocation3], 1
    %1629 = vsyncpa [#allocation4], 1
    %1630 = vsyncpa [#allocation5], 1

</llo_original>
